<compile_context>
chip_gen: v7x
topology: tpu7x:2x2x1
jax: 0.10.0
libtpu: 0.0.40
codegen_flags: <defaults>
</compile_context>

<pallas_src>
import functools
import numpy as np

import jax
import jax.numpy as jnp
from jax import lax
from jax.experimental import pallas as pl
from jax.experimental.pallas import tpu as pltpu

BN_EPS = 1e-5
# eval-mode BatchNorm with running_mean=0, running_var=1, gamma=1, beta=0
_BN_SCALE = float(1.0 / np.sqrt(1.0 + BN_EPS))


def _round_up(x, m):
    return ((x + m - 1) // m) * m


def _tpu_config():
    """Generation-dependent VMEM budget / tile maxima (v5e/v6e 128 MiB, v7x 64 MiB/TC)."""
    vmem_cap = None
    try:
        info = pltpu.get_tpu_info()
        for attr in ("vmem_capacity_bytes", "vmem_size_bytes", "vmem_bytes"):
            v = getattr(info, attr, None)
            if v:
                vmem_cap = int(v)
                break
    except Exception:
        pass
    if vmem_cap is None:
        vmem_cap = 64 * 1024 * 1024                  # conservative: v7x per-TC
    if vmem_cap >= 100 * 1024 * 1024:                # v5e / v6e
        return 96 * 1024 * 1024, 512, 1024, 512
    return 44 * 1024 * 1024, 512, 1024, 512          # v7x (N-tiling keeps blocks small)


_VMEM_LIMIT, _TM_MAX, _TK_MAX, _TN_MAX = _tpu_config()


# ----------------------------------------------------------------------------
# Pallas kernels
# ----------------------------------------------------------------------------
def _act(y, act):
    if act == "relu":
        return jnp.maximum(y, 0.0)
    if act == "sigmoid":
        return pl.reciprocal(1.0 + jnp.exp(-y), approx=True)
    return y


def _mm_kernel(p_ref, w_ref, s_ref, b_ref, o_ref, acc_ref, *, act):
    # p: (1,tm,tk) bf16 patches, w: (tk,tn) bf16, s/b: (1,tn) folded BN
    k = pl.program_id(3)

    @pl.when(k == 0)
    def _init():
        acc_ref[...] = jnp.zeros_like(acc_ref)

    acc_ref[...] += jnp.dot(p_ref[0], w_ref[...],
                            preferred_element_type=jnp.float32)

    @pl.when(k == pl.num_programs(3) - 1)
    def _fin():
        y = _act(acc_ref[...] * s_ref[...] + b_ref[...], act)
        o_ref[0] = y.astype(o_ref.dtype)


def _mm_kernel_vec(p_ref, w_ref, s_ref, b_ref, a_ref, o_ref, acc_ref, *, act):
    # a: (1,1,tn) broadcast add (f32), applied before the activation
    k = pl.program_id(3)

    @pl.when(k == 0)
    def _init():
        acc_ref[...] = jnp.zeros_like(acc_ref)

    acc_ref[...] += jnp.dot(p_ref[0], w_ref[...],
                            preferred_element_type=jnp.float32)

    @pl.when(k == pl.num_programs(3) - 1)
    def _fin():
        y = _act(acc_ref[...] * s_ref[...] + b_ref[...] + a_ref[0], act)
        o_ref[0] = y.astype(o_ref.dtype)


def _mm_kernel_full(p_ref, w_ref, s_ref, b_ref, a_ref, o_ref, acc_ref, *, act, after):
    # a: (1,tm,tn) per-pixel residual (bf16), fused before or after activation
    k = pl.program_id(3)

    @pl.when(k == 0)
    def _init():
        acc_ref[...] = jnp.zeros_like(acc_ref)

    acc_ref[...] += jnp.dot(p_ref[0], w_ref[...],
                            preferred_element_type=jnp.float32)

    @pl.when(k == pl.num_programs(3) - 1)
    def _fin():
        a = a_ref[0].astype(jnp.float32)
        y = acc_ref[...] * s_ref[...] + b_ref[...]
        if after:
            y = _act(y, act) + a
        else:
            y = _act(y + a, act)
        o_ref[0] = y.astype(o_ref.dtype)


@functools.lru_cache(maxsize=None)
def _mm_call(B, Mp, Kp, Np, tm, tk, tn, add_mode, ba, act, after, out_dtype):
    nm, nn, nk = Mp // tm, Np // tn, Kp // tk
    in_specs = [pl.BlockSpec((1, tm, tk), lambda b, m, n, k: (b, m, k)),
                pl.BlockSpec((tk, tn), lambda b, m, n, k: (k, n)),
                pl.BlockSpec((1, tn), lambda b, m, n, k: (0, n)),
                pl.BlockSpec((1, tn), lambda b, m, n, k: (0, n))]
    if add_mode == 0:
        kern = functools.partial(_mm_kernel, act=act)
    elif add_mode == 1:
        if ba == 1:
            amap = lambda b, m, n, k: (0, 0, n)
        else:
            amap = lambda b, m, n, k: (b, 0, n)
        in_specs.append(pl.BlockSpec((1, 1, tn), amap))
        kern = functools.partial(_mm_kernel_vec, act=act)
    else:
        in_specs.append(pl.BlockSpec((1, tm, tn), lambda b, m, n, k: (b, m, n)))
        kern = functools.partial(_mm_kernel_full, act=act, after=after)
    return jax.jit(pl.pallas_call(
        kern,
        grid=(B, nm, nn, nk),
        in_specs=in_specs,
        out_specs=pl.BlockSpec((1, tm, tn), lambda b, m, n, k: (b, m, n)),
        out_shape=jax.ShapeDtypeStruct((B, Mp, Np), jnp.dtype(out_dtype)),
        scratch_shapes=[pltpu.VMEM((tm, tn), jnp.float32)],
        compiler_params=pltpu.CompilerParams(
            dimension_semantics=("parallel", "parallel", "parallel", "arbitrary"),
            vmem_limit_bytes=_VMEM_LIMIT),
    ))


def _ca_kernel(x_ref, g_ref, o_ref):
    # channel attention: E = X^T X (symmetric) over spatial; column-softmax of a
    # symmetric matrix equals the transposed row-softmax, so out = X @ attn^T.
    x = x_ref[0]                                                     # (HW, C) bf16
    energy = lax.dot_general(x, x, (((0,), (0,)), ((), ())),
                             preferred_element_type=jnp.float32)     # (C, C)
    e = jnp.exp(energy - jnp.max(energy, axis=0, keepdims=True))
    attn_t = e * pl.reciprocal(jnp.sum(e, axis=0, keepdims=True), approx=True)
    out = jnp.dot(x, attn_t.astype(x.dtype),
                  preferred_element_type=jnp.float32)                # (HW, C)
    o_ref[0] = (g_ref[...] * out + x.astype(jnp.float32)).astype(o_ref.dtype)


@functools.lru_cache(maxsize=None)
def _ca_call(B, M, C):
    # Full-spatial reduction (C x C energy) -> no M-tiling; C=64 so it is tiny.
    return jax.jit(pl.pallas_call(
        _ca_kernel,
        grid=(B,),
        in_specs=[pl.BlockSpec((1, M, C), lambda b: (b, 0, 0)),
                  pl.BlockSpec((1, 1), lambda b: (0, 0))],
        out_specs=pl.BlockSpec((1, M, C), lambda b: (b, 0, 0)),
        out_shape=jax.ShapeDtypeStruct((B, M, C), jnp.bfloat16),
        compiler_params=pltpu.CompilerParams(
            dimension_semantics=("parallel",),
            vmem_limit_bytes=_VMEM_LIMIT),
    ))


def _sa_kernel(x_ref, q_ref, k_ref, v_ref, g_ref, o_ref, *, n_real):
    # spatial attention over a tile of query rows (full K/V resident)
    x = x_ref[0]                                                     # (rm, C)
    q = q_ref[0]                                                     # (rm, C8)
    k = k_ref[0]                                                     # (Mp, C8)
    v = v_ref[0]                                                     # (Mp, C)
    energy = lax.dot_general(q, k, (((1,), (1,)), ((), ())),
                             preferred_element_type=jnp.float32)     # (rm, Mp)
    if n_real != k.shape[0]:                                         # mask padded keys
        col = lax.broadcasted_iota(jnp.int32, energy.shape, 1)
        energy = jnp.where(col < n_real, energy, -jnp.inf)
    e = jnp.exp(energy - jnp.max(energy, axis=-1, keepdims=True))
    attn = e * pl.reciprocal(jnp.sum(e, axis=-1, keepdims=True), approx=True)
    out = jnp.dot(attn.astype(v.dtype), v, preferred_element_type=jnp.float32)
    o_ref[0] = (g_ref[...] * out + x.astype(jnp.float32)).astype(o_ref.dtype)


@functools.lru_cache(maxsize=None)
def _sa_call(B, Mp, rm, C, C8, n_real):
    kern = functools.partial(_sa_kernel, n_real=n_real)
    return jax.jit(pl.pallas_call(
        kern,
        grid=(B, Mp // rm),
        in_specs=[pl.BlockSpec((1, rm, C), lambda b, m: (b, m, 0)),
                  pl.BlockSpec((1, rm, C8), lambda b, m: (b, m, 0)),
                  pl.BlockSpec((1, Mp, C8), lambda b, m: (b, 0, 0)),
                  pl.BlockSpec((1, Mp, C), lambda b, m: (b, 0, 0)),
                  pl.BlockSpec((1, 1), lambda b, m: (0, 0))],
        out_specs=pl.BlockSpec((1, rm, C), lambda b, m: (b, m, 0)),
        out_shape=jax.ShapeDtypeStruct((B, Mp, C), jnp.bfloat16),
        compiler_params=pltpu.CompilerParams(
            dimension_semantics=("parallel", "parallel"),
            vmem_limit_bytes=_VMEM_LIMIT),
    ))


def _focus_split_kernel(x_ref, m_ref, f_ref, b_ref):
    # fused sigmoid(map) + foreground/background gating (one pass over x)
    x = x_ref[0]                                                     # (rm, C) bf16
    sig = pl.reciprocal(1.0 + jnp.exp(-m_ref[0]), approx=True)       # (rm, 1) f32
    f_ref[0] = (x * sig).astype(f_ref.dtype)
    b_ref[0] = (x * (1.0 - sig)).astype(b_ref.dtype)


@functools.lru_cache(maxsize=None)
def _focus_split_call(B, Mp, rm, C):
    return jax.jit(pl.pallas_call(
        _focus_split_kernel,
        grid=(B, Mp // rm),
        in_specs=[pl.BlockSpec((1, rm, C), lambda b, m: (b, m, 0)),
                  pl.BlockSpec((1, rm, 1), lambda b, m: (b, m, 0))],
        out_specs=(pl.BlockSpec((1, rm, C), lambda b, m: (b, m, 0)),
                   pl.BlockSpec((1, rm, C), lambda b, m: (b, m, 0))),
        out_shape=(jax.ShapeDtypeStruct((B, Mp, C), jnp.bfloat16),
                   jax.ShapeDtypeStruct((B, Mp, C), jnp.bfloat16)),
        compiler_params=pltpu.CompilerParams(
            dimension_semantics=("parallel", "parallel"),
            vmem_limit_bytes=_VMEM_LIMIT),
    ))


def _focus_refine_kernel(y_ref, fp_ref, fn_ref, a_ref, b_ref, o_ref):
    # fused  relu(BN(y - alpha*fp))  and  relu(BN(r1 + beta*fn))
    y = y_ref[0].astype(jnp.float32)
    fp = fp_ref[0].astype(jnp.float32)
    fn = fn_ref[0].astype(jnp.float32)
    r1 = jnp.maximum((y - a_ref[...] * fp) * _BN_SCALE, 0.0)
    r2 = jnp.maximum((r1 + b_ref[...] * fn) * _BN_SCALE, 0.0)
    o_ref[0] = r2.astype(o_ref.dtype)


@functools.lru_cache(maxsize=None)
def _focus_refine_call(B, Mp, rm, C):
    return jax.jit(pl.pallas_call(
        _focus_refine_kernel,
        grid=(B, Mp // rm),
        in_specs=[pl.BlockSpec((1, rm, C), lambda b, m: (b, m, 0)),
                  pl.BlockSpec((1, rm, C), lambda b, m: (b, m, 0)),
                  pl.BlockSpec((1, rm, C), lambda b, m: (b, m, 0)),
                  pl.BlockSpec((1, 1), lambda b, m: (0, 0)),
                  pl.BlockSpec((1, 1), lambda b, m: (0, 0))],
        out_specs=pl.BlockSpec((1, rm, C), lambda b, m: (b, m, 0)),
        out_shape=jax.ShapeDtypeStruct((B, Mp, C), jnp.bfloat16),
        compiler_params=pltpu.CompilerParams(
            dimension_semantics=("parallel", "parallel"),
            vmem_limit_bytes=_VMEM_LIMIT),
    ))


def _row_tiles(M):
    if M <= 1024:
        return M, M                      # full-array block is always legal
    Mp = _round_up(M, 512)
    return Mp, 512


# ----------------------------------------------------------------------------
# Glue helpers (reshapes / resizes / pooling) in plain JAX
# ----------------------------------------------------------------------------
def _lin_coords(out, inn, align_corners):
    i = np.arange(out, dtype=np.float64)
    if align_corners:
        src = i * ((inn - 1) / (out - 1)) if out > 1 else np.zeros_like(i)
    else:
        src = (i + 0.5) * (inn / out) - 0.5
    src = np.clip(src, 0.0, inn - 1)
    i0 = np.floor(src).astype(np.int32)
    i1 = np.minimum(i0 + 1, inn - 1)
    w = (src - i0).astype(np.float32)
    return i0, i1, w


def resize_bilinear(x, oh, ow, align_corners):
    B, H, W, C = x.shape
    h0, h1, hw = _lin_coords(oh, H, align_corners)
    w0, w1, ww = _lin_coords(ow, W, align_corners)
    xh = x[:, h0, :, :] * (1.0 - hw)[None, :, None, None] + \
         x[:, h1, :, :] * hw[None, :, None, None]
    y = xh[:, :, w0, :] * (1.0 - ww)[None, None, :, None] + \
        xh[:, :, w1, :] * ww[None, None, :, None]
    return y


def cus_sample(y, scale_factor=2):
    # TODO(synk): `cus_sample` is an external helper; assumed nearest-neighbor upsample.
    return jnp.repeat(jnp.repeat(y, scale_factor, axis=1), scale_factor, axis=2)


def upsample_add(x, y):
    # TODO(synk): `upsample_add` is an external helper; assumed y + bilinear(x -> y size).
    B, H, W, C = y.shape
    return y + resize_bilinear(x, H, W, align_corners=False)


def adaptive_avg_pool(x, oh, ow):
    B, H, W, C = x.shape
    rows = []
    for i in range(oh):
        h0, h1 = (i * H) // oh, -((-(i + 1) * H) // oh)
        cols = []
        for j in range(ow):
            w0, w1 = (j * W) // ow, -((-(j + 1) * W) // ow)
            cols.append(jnp.mean(x[:, h0:h1, w0:w1, :], axis=(1, 2)))
        rows.append(jnp.stack(cols, axis=1))
    return jnp.stack(rows, axis=1)


def avg_pool2(x):
    B, H, W, C = x.shape
    return x.reshape(B, H // 2, 2, W // 2, 2, C).mean(axis=(2, 4))


def max_pool3_s2_p1(x):
    B, H, W, C = x.shape
    neg = jnp.asarray(-jnp.inf, x.dtype)
    xp = jnp.pad(x, ((0, 0), (1, 1), (1, 1), (0, 0)), constant_values=neg)
    ho, wo = (H + 2 - 3) // 2 + 1, (W + 2 - 3) // 2 + 1
    out = None
    for i in range(3):
        for j in range(3):
            s = xp[:, i:i + (ho - 1) * 2 + 1:2, j:j + (wo - 1) * 2 + 1:2, :]
            out = s if out is None else jnp.maximum(out, s)
    return out


# ----------------------------------------------------------------------------
# Parameter construction (deterministic, synthetic)
# ----------------------------------------------------------------------------
class KeyGen:
    def __init__(self, seed=0):
        self._key = jax.random.PRNGKey(seed)

    def __call__(self):
        self._key, k = jax.random.split(self._key)
        return k


def make_conv(kg, cin, cout, k, stride=1, padding=0, dilation=1, bn=True,
              act=None, cin_phys=None, pad_out=True, out_dtype="bfloat16"):
    kh, kw = (k, k) if isinstance(k, int) else tuple(k)
    ph, pw = (padding, padding) if isinstance(padding, int) else tuple(padding)
    cin_phys = cin if cin_phys is None else cin_phys
    Np = _round_up(cout, 128) if pad_out else cout                   # lane-dense output
    K = kh * kw * cin_phys
    Kp0 = _round_up(K, 128)
    if Kp0 <= _TK_MAX:
        tk, Kp = Kp0, Kp0
    else:
        nk = -(-Kp0 // _TK_MAX)
        tk = _round_up(-(-Kp0 // nk), 128)
        Kp = tk * nk
    tn = Np if Np <= _TN_MAX else _TN_MAX
    assert Np % tn == 0

    std = 1.0 / np.sqrt(kh * kw * cin)
    w_real = jax.random.normal(kg(), (kh * kw, cin, cout), jnp.float32) * std
    # real weights only on the real input-channel rows / real output columns
    # -> padded channels stay exactly zero throughout the network.
    w = jnp.zeros((kh * kw, cin_phys, Np), jnp.float32)
    w = w.at[:, :cin, :cout].set(w_real).reshape(kh * kw * cin_phys, Np)
    w = jnp.pad(w, ((0, Kp - K), (0, 0))).astype(jnp.bfloat16)
    scale = jnp.zeros((1, Np), jnp.float32).at[:, :cout].set(
        _BN_SCALE if bn else 1.0)
    bias = jnp.zeros((1, Np), jnp.float32)   # conv bias / BN beta initialised to 0
    return dict(w=w, scale=scale, bias=bias, kh=kh, kw=kw, stride=stride,
                ph=ph, pw=pw, dil=dilation, act=act, cout=Np, n_orig=cout,
                K=K, Kp=Kp, tk=tk, tn=tn, cin_phys=cin_phys, out_dtype=out_dtype)


def conv_apply(p, x, add_vec=None, add_full=None, add_after_act=False):
    B, H, W, Cp = x.shape
    assert Cp == p["cin_phys"], (Cp, p["cin_phys"])
    kh, kw, s, ph, pw, d = p["kh"], p["kw"], p["stride"], p["ph"], p["pw"], p["dil"]
    if kh == 1 and kw == 1 and s == 1 and ph == 0 and pw == 0:
        ho, wo = H, W
        pat = x.reshape(B, H * W, Cp)
    else:
        xp = jnp.pad(x, ((0, 0), (ph, ph), (pw, pw), (0, 0)))
        ho = (H + 2 * ph - (d * (kh - 1) + 1)) // s + 1
        wo = (W + 2 * pw - (d * (kw - 1) + 1)) // s + 1
        cols = [xp[:, i * d:i * d + (ho - 1) * s + 1:s,
                   j * d:j * d + (wo - 1) * s + 1:s, :]
                for i in range(kh) for j in range(kw)]
        pat = jnp.stack(cols, axis=3).reshape(B, ho * wo, kh * kw * Cp)

    M, K, Kp, tk, Np, tn = ho * wo, p["K"], p["Kp"], p["tk"], p["cout"], p["tn"]
    if M > _TM_MAX:
        tm, Mp = _TM_MAX, _round_up(M, _TM_MAX)
    else:
        Mp = _round_up(M, 16)            # bf16 sublane packing
        tm = Mp
    pat = pat.astype(jnp.bfloat16)
    if Mp != M or Kp != K:
        pat = jnp.pad(pat, ((0, 0), (0, Mp - M), (0, Kp - K)))

    if add_full is not None:             # per-pixel residual fused into the epilogue
        af = add_full.reshape(B, -1, add_full.shape[-1]).astype(jnp.bfloat16)
        assert af.shape[1] == M and af.shape[2] == Np, (af.shape, M, Np)
        if Mp != M:
            af = jnp.pad(af, ((0, 0), (0, Mp - M), (0, 0)))
        out = _mm_call(B, Mp, Kp, Np, tm, tk, tn, 2, 0, p["act"],
                       bool(add_after_act), p["out_dtype"])(
            pat, p["w"], p["scale"], p["bias"], af)
    elif add_vec is not None:            # broadcast add (MSCA global branch)
        av = add_vec.reshape(add_vec.shape[0], 1, -1).astype(jnp.float32)
        if av.shape[-1] != Np:
            av = jnp.pad(av, ((0, 0), (0, 0), (0, Np - av.shape[-1])))
        out = _mm_call(B, Mp, Kp, Np, tm, tk, tn, 1, av.shape[0], p["act"],
                       False, p["out_dtype"])(
            pat, p["w"], p["scale"], p["bias"], av)
    else:
        out = _mm_call(B, Mp, Kp, Np, tm, tk, tn, 0, 0, p["act"],
                       False, p["out_dtype"])(
            pat, p["w"], p["scale"], p["bias"])
    if Mp != M:
        out = out[:, :M]
    return out.reshape(B, ho, wo, Np)


def _seq(convs, x):
    for c in convs:
        x = conv_apply(c, x)
    return x


# --------------------------------- modules ----------------------------------
def make_msca(kg, channels=64, phys=128, r=4):
    oc = channels // r
    # l2 carries the fused (+xg, sigmoid) epilogue of the whole MSCA block.
    return dict(l1=make_conv(kg, channels, oc, 1, act="relu", cin_phys=phys, pad_out=False),
                l2=make_conv(kg, oc, channels, 1, act="sigmoid"),
                g1=make_conv(kg, channels, oc, 1, act="relu", cin_phys=phys, pad_out=False),
                g2=make_conv(kg, oc, channels, 1))


def msca_apply(p, x):
    B = x.shape[0]
    pooled = jnp.mean(x, axis=(1, 2), keepdims=True, dtype=jnp.float32)
    xg = conv_apply(p["g2"], conv_apply(p["g1"], pooled))
    # wei = sigmoid(xl + xg) fused into the l2 conv epilogue (broadcast add).
    return conv_apply(p["l2"], conv_apply(p["l1"], x), add_vec=xg.reshape(B, -1))


def make_acfm(kg, channel=64, phys=128):
    return dict(msca=make_msca(kg, channel, phys),
                conv=make_conv(kg, channel, channel, 3, padding=1, act="relu",
                               cin_phys=phys))


def acfm_apply(p, x, y, ppm_add=None):
    y = cus_sample(y, 2)
    wei = msca_apply(p["msca"], x + y)
    xo = x * wei + y * (1.0 - wei)
    if ppm_add is not None:
        # upsample_add(ppm, .) fused into the conv epilogue (after the ReLU).
        return conv_apply(p["conv"], xo, add_full=ppm_add, add_after_act=True)
    return conv_apply(p["conv"], xo)


def make_dgcm(kg, channel=64, phys=128):
    return dict(h2l=make_conv(kg, channel, channel, 3, padding=1, act="relu", cin_phys=phys),
                h2h=make_conv(kg, channel, channel, 3, padding=1, act="relu", cin_phys=phys),
                mscah=make_msca(kg, channel, phys), mscal=make_msca(kg, channel, phys),
                conv=make_conv(kg, channel, channel, 3, padding=1, act="relu",
                               cin_phys=phys))


def dgcm_apply(p, x, res=None):
    x_h = conv_apply(p["h2h"], x)
    x_l = conv_apply(p["h2l"], avg_pool2(x))
    x_h = x_h * msca_apply(p["mscah"], x_h)
    x_l = x_l * msca_apply(p["mscal"], x_l)
    out = upsample_add(x_l, x_h)
    if res is not None:
        # dgcm(x) + x fused into the final conv epilogue (after the ReLU).
        return conv_apply(p["conv"], out, add_full=res, add_after_act=True)
    return conv_apply(p["conv"], out)


def make_ceb(kg, cin, cin_phys):
    cs = cin // 4
    # Intermediates that feed channel splits stay exact-width (16ch) so the
    # in-module adds / concat do not round-trip 8x-padded tensors.
    return dict(
        r=make_conv(kg, cin, 4 * cs, 1, act="relu", cin_phys=cin_phys, pad_out=False),
        p1=make_conv(kg, cs, cs, 1, act="relu", pad_out=False),
        p1dc=make_conv(kg, cs, cs, 3, padding=1, dilation=1, act="relu", pad_out=False),
        p2=make_conv(kg, cs, cs, 3, padding=1, act="relu", pad_out=False),
        p2dc=make_conv(kg, cs, cs, 3, padding=2, dilation=2, act="relu", pad_out=False),
        p3=make_conv(kg, cs, cs, 5, padding=2, act="relu", pad_out=False),
        p3dc=make_conv(kg, cs, cs, 3, padding=4, dilation=4, act="relu", pad_out=False),
        p4=make_conv(kg, cs, cs, 7, padding=3, act="relu", pad_out=False),
        p4dc=make_conv(kg, cs, cs, 3, padding=8, dilation=8, act="relu", pad_out=False),
        fusion=make_conv(kg, cin, cin, 1, act="relu", cin_phys=4 * cs))


def ceb_apply(p, x):
    r = conv_apply(p["r"], x)
    cs = p["p1"]["cin_phys"]
    r1, r2, r3, r4 = (r[..., i * cs:(i + 1) * cs] for i in range(4))
    p1 = conv_apply(p["p1"], r1)
    p1dc = conv_apply(p["p1dc"], p1)
    p2 = conv_apply(p["p2"], r2 + p1dc)
    p2dc = conv_apply(p["p2dc"], p2)
    p3 = conv_apply(p["p3"], r3 + p2dc)
    p3dc = conv_apply(p["p3dc"], p3)
    p4 = conv_apply(p["p4"], r4 + p3dc)
    p4dc = conv_apply(p["p4dc"], p4)
    return conv_apply(p["fusion"],
                      jnp.concatenate([p1dc, p2dc, p3dc, p4dc], axis=-1))


def make_focus(kg, c1, c2, phys=128):
    # Note: the `self.up` branch of Focus is defined but never used in forward; omitted.
    return dict(output_map=make_conv(kg, c1, 1, 7, padding=3, bn=False, cin_phys=phys),
                fp=make_ceb(kg, c1, phys), fn=make_ceb(kg, c1, phys),
                alpha=jnp.ones((1, 1), jnp.float32), beta=jnp.ones((1, 1), jnp.float32))


def focus_apply(p, x, y, in_map):
    B, H, W, Cp = x.shape
    mh, mw = in_map.shape[1], in_map.shape[2]
    map_logits = resize_bilinear(in_map, 2 * mh, 2 * mw, align_corners=True)
    M = H * W
    Mp, rm = _row_tiles(M)
    xf = x.reshape(B, M, Cp)
    mf = map_logits.reshape(B, M, 1).astype(jnp.float32)
    if Mp != M:
        xf = jnp.pad(xf, ((0, 0), (0, Mp - M), (0, 0)))
        mf = jnp.pad(mf, ((0, 0), (0, Mp - M), (0, 0)))
    f_feat, b_feat = _focus_split_call(B, Mp, rm, Cp)(xf, mf)
    f_feat = f_feat[:, :M].reshape(B, H, W, Cp)
    b_feat = b_feat[:, :M].reshape(B, H, W, Cp)
    fp = ceb_apply(p["fp"], f_feat)
    fn = ceb_apply(p["fn"], b_feat)
    yf = y.reshape(B, M, Cp)
    fpf = fp.reshape(B, M, Cp)
    fnf = fn.reshape(B, M, Cp)
    if Mp != M:
        yf, fpf, fnf = (jnp.pad(a, ((0, 0), (0, Mp - M), (0, 0)))
                        for a in (yf, fpf, fnf))
    refine2 = _focus_refine_call(B, Mp, rm, Cp)(
        yf, fpf, fnf, p["alpha"], p["beta"])[:, :M].reshape(B, H, W, Cp)
    out_map = conv_apply(p["output_map"], refine2)[..., :1]
    return refine2, out_map


def make_ppm(kg, cin, cout):
    ic = cin // 4
    return dict(c=[make_conv(kg, cin, ic, 1, bn=False) for _ in range(4)],
                out=make_conv(kg, cin * 2, cout, 1, bn=False))


def ppm_apply(p, x):
    B, H, W, C = x.shape
    feats = [x]
    for size, cp in zip((1, 2, 3, 6), p["c"]):
        o = conv_apply(cp, adaptive_avg_pool(x, size, size))
        feats.append(resize_bilinear(o, H, W, align_corners=True).astype(jnp.bfloat16))
    return conv_apply(p["out"], jnp.concatenate(feats, axis=-1))


def make_positioning(kg, channel):
    c8 = channel // 8
    return dict(ca_gamma=jnp.ones((1, 1), jnp.float32),
                # q/k/v 1x1 projections batched into one matmul, lane-padded to 128
                qkv=make_conv(kg, channel, 2 * c8 + channel, 1, bn=False),
                sa_gamma=jnp.ones((1, 1), jnp.float32),
                map=make_conv(kg, channel, 1, 7, padding=3, bn=False,
                              out_dtype="float32"))


def positioning_apply(p, x):
    B, H, W, Cp = x.shape
    C, c8 = 64, 8
    xr = x[..., :C].reshape(B, H * W, C)          # CA/SA work on the 64 real channels
    cab = _ca_call(B, H * W, C)(xr, p["ca_gamma"])
    cab_img = cab.reshape(B, H, W, C)
    qkv = conv_apply(p["qkv"], cab_img)
    q = qkv[..., :c8].reshape(B, H * W, c8)
    k = qkv[..., c8:2 * c8].reshape(B, H * W, c8)
    v = qkv[..., 2 * c8:2 * c8 + C].reshape(B, H * W, C)
    M = H * W
    Mp, rm = _row_tiles(M)
    xs, qs, ks, vs = cab, q, k, v
    if Mp != M:
        pad = ((0, 0), (0, Mp - M), (0, 0))
        xs, qs, ks, vs = (jnp.pad(a, pad) for a in (cab, q, k, v))
    sab = _sa_call(B, Mp, rm, C, c8, M)(xs, qs, ks, vs, p["sa_gamma"])[:, :M]
    sab_img = sab.reshape(B, H, W, C)
    out_map = conv_apply(p["map"], sab_img)[..., :1]      # f32, 1 channel
    sab_phys = jnp.pad(sab_img, ((0, 0), (0, 0), (0, 0), (0, Cp - C)))
    return sab_phys, out_map


def make_rfb(kg, cin, cout):
    return dict(
        # b0/b1/b2/b3 entry 1x1s and conv_res all read the same input:
        # batched into one (cin -> 5*cout) matmul; res is the last segment so
        # the padded slice [4c:4c+128] is already lane-dense for the fused add.
        entry=make_conv(kg, cin, 5 * cout, 1),
        b1=[make_conv(kg, cout, cout, (1, 3), padding=(0, 1), pad_out=False),
            make_conv(kg, cout, cout, (3, 1), padding=(1, 0), pad_out=False),
            make_conv(kg, cout, cout, 3, padding=3, dilation=3, pad_out=False)],
        b2=[make_conv(kg, cout, cout, (1, 5), padding=(0, 2), pad_out=False),
            make_conv(kg, cout, cout, (5, 1), padding=(2, 0), pad_out=False),
            make_conv(kg, cout, cout, 3, padding=5, dilation=5, pad_out=False)],
        b3=[make_conv(kg, cout, cout, (1, 7), padding=(0, 3), pad_out=False),
            make_conv(kg, cout, cout, (7, 1), padding=(3, 0), pad_out=False),
            make_conv(kg, cout, cout, 3, padding=7, dilation=7, pad_out=False)],
        cat=make_conv(kg, 4 * cout, cout, 3, padding=1, act="relu"))


def rfb_apply(p, x):
    e = conv_apply(p["entry"], x)
    c = 64
    x0 = e[..., :c]
    x1 = _seq(p["b1"], e[..., c:2 * c])
    x2 = _seq(p["b2"], e[..., 2 * c:3 * c])
    x3 = _seq(p["b3"], e[..., 3 * c:4 * c])
    res = e[..., 4 * c:4 * c + 128]                    # 64 real + 64 zero lanes
    # relu(bn(conv_cat(cat)) + conv_res(x)) fused into the cat-conv epilogue.
    return conv_apply(p["cat"], jnp.concatenate([x0, x1, x2, x3], axis=-1),
                      add_full=res)


def make_backbone(kg):
    # TODO(synk): res2net50_v1b_26w_4s is an external pretrained backbone; replaced by a
    # deterministic surrogate reproducing the stage output channels/strides (256/512/1024/2048 @ /4../32).
    return dict(stem=make_conv(kg, 3, 64, 7, stride=2, padding=3, act="relu"),
                layer1=make_conv(kg, 64, 256, 1, stride=1, act="relu", cin_phys=128),
                layer2=make_conv(kg, 256, 512, 1, stride=2, act="relu"),
                layer3=make_conv(kg, 512, 1024, 1, stride=2, act="relu"),
                layer4=make_conv(kg, 1024, 2048, 1, stride=2, act="relu"))


def backbone_apply(p, x):
    x = conv_apply(p["stem"], x)
    x = max_pool3_s2_p1(x)
    x1 = conv_apply(p["layer1"], x)
    x2 = conv_apply(p["layer2"], x1)
    x3 = conv_apply(p["layer3"], x2)
    x4 = conv_apply(p["layer4"], x3)
    return x1, x2, x3, x4


def make_c2fnet(kg, channel=64):
    # acfm0 / dgcm0 exist in the PyTorch module but are unused in forward; omitted.
    return dict(backbone=make_backbone(kg),
                rfb1=make_rfb(kg, 256, channel), rfb2=make_rfb(kg, 512, channel),
                rfb3=make_rfb(kg, 1024, channel), rfb4=make_rfb(kg, 2048, channel),
                ppm=make_ppm(kg, 2048, 64),
                position=make_positioning(kg, 64),
                focus43=make_focus(kg, 64, 64),
                acfm3=make_acfm(kg), acfm2=make_acfm(kg), acfm1=make_acfm(kg),
                dgcm3=make_dgcm(kg), dgcm2=make_dgcm(kg), dgcm1=make_dgcm(kg),
                upconv3=make_conv(kg, 64, 64, 3, padding=1, act="relu", cin_phys=128),
                upconv2=make_conv(kg, 64, 64, 3, padding=1, act="relu", cin_phys=128),
                classifier=make_conv(kg, 64, 1, 1, bn=False, cin_phys=128,
                                     out_dtype="float32"))


def c2fnet_forward(p, x_nchw):
    x = jnp.transpose(x_nchw, (0, 2, 3, 1)).astype(jnp.float32)   # NCHW -> NHWC
    x1, x2, x3, x4 = backbone_apply(p["backbone"], x)
    ppm = ppm_apply(p["ppm"], x4)
    x1_rfb = rfb_apply(p["rfb1"], x1)
    x2_rfb = rfb_apply(p["rfb2"], x2)
    x3_rfb = rfb_apply(p["rfb3"], x3)
    x4_rfb = rfb_apply(p["rfb4"], x4)

    position4, pre4 = positioning_apply(p["position"], x4_rfb)

    # stage 3  (upsample_add(ppm, .) fused into the ACFM conv epilogue)
    _, H3, W3, _ = x3_rfb.shape
    ppm3 = resize_bilinear(ppm, H3, W3, align_corners=False).astype(jnp.bfloat16)
    x43 = acfm_apply(p["acfm3"], x3_rfb, position4, ppm_add=ppm3)
    dgcm43 = dgcm_apply(p["dgcm3"], x43)
    focus43, pre43 = focus_apply(p["focus43"], x3_rfb, dgcm43, pre4)
    # PyTorch recomputes self.dgcm3(x43); in eval mode it is identical -> reuse.
    out43 = conv_apply(p["upconv3"], dgcm43 + focus43)

    _, H2, W2, _ = x2_rfb.shape
    ppm2 = resize_bilinear(ppm, H2, W2, align_corners=False).astype(jnp.bfloat16)
    x432 = acfm_apply(p["acfm2"], x2_rfb, out43, ppm_add=ppm2)
    out432 = conv_apply(p["upconv2"], dgcm_apply(p["dgcm2"], x432, res=x432))

    _, H1, W1, _ = x1_rfb.shape
    ppm1 = resize_bilinear(ppm, H1, W1, align_corners=False).astype(jnp.bfloat16)
    x4321 = acfm_apply(p["acfm1"], x1_rfb, out432, ppm_add=ppm1)
    # PyTorch reuses self.upconv2 for the final decoder stage as well.
    out4321 = conv_apply(p["upconv2"], dgcm_apply(p["dgcm1"], x4321, res=x4321))

    f_out = conv_apply(p["classifier"], out4321)[..., :1]

    _, Hp_, Wp_, _ = pre4.shape
    pre4_up = resize_bilinear(pre4, 32 * Hp_, 32 * Wp_, align_corners=True)
    _, Hf, Wf, _ = f_out.shape
    f_out_up = resize_bilinear(f_out, 4 * Hf, 4 * Wf, align_corners=False)

    return (jnp.transpose(f_out_up, (0, 3, 1, 2)),   # NHWC -> NCHW
            jnp.transpose(pre4_up, (0, 3, 1, 2)))


if __name__ == "__main__":
    kg = KeyGen(0)
    params = make_c2fnet(kg)

    key = jax.random.PRNGKey(0)
    x = jax.random.normal(key, (1, 3, 64, 64), jnp.float32)   # NCHW like PyTorch

    f_out, pre4 = c2fnet_forward(params, x)
    jax.block_until_ready((f_out, pre4))

    assert f_out.shape == (1, 1, 64, 64), f_out.shape
    assert pre4.shape == (1, 1, 64, 64), pre4.shape
    assert np.isfinite(np.asarray(f_out)).all() and np.isfinite(np.asarray(pre4)).all()
    print("KERNEL_OK")
</pallas_src>

<mosaic_0001>
module attributes {stable_mosaic.version = 11 : i64} {
  func.func @_mm_kernel(%arg0: i32, %arg1: i32, %arg2: i32, %arg3: i32, %arg4: memref<1x512x256xbf16, #tpu.memory_space<vmem>>, %arg5: memref<256x128xbf16, #tpu.memory_space<vmem>>, %arg6: memref<1x128xf32, #tpu.memory_space<vmem>>, %arg7: memref<1x128xf32, #tpu.memory_space<vmem>>, %arg8: memref<1x512x128xbf16, #tpu.memory_space<vmem>>, %arg9: memref<512x128xf32, #tpu.memory_space<vmem>>) attributes {dimension_semantics = [#tpu.dimension_semantics<parallel>, #tpu.dimension_semantics<parallel>, #tpu.dimension_semantics<parallel>, #tpu.dimension_semantics<arbitrary>], iteration_bounds = array<i64: 1, 2, 1, 1>, scalar_prefetch = 0 : i64, scratch_operands = 1 : i64, tpu.core_type = #tpu.core_type<tc>, window_params = [{transform_indices = @transform_0, window_bounds = array<i64: 1, 512, 256>}, {transform_indices = @transform_1, window_bounds = array<i64: 256, 128>}, {transform_indices = @transform_2, window_bounds = array<i64: 1, 128>}, {transform_indices = @transform_3, window_bounds = array<i64: 1, 128>}, {transform_indices = @transform_4, window_bounds = array<i64: 1, 512, 128>}]} {
    %c0_i32 = arith.constant 0 : i32
    %0 = arith.cmpi eq, %arg3, %c0_i32 : i32
    %1 = arith.extui %0 : i1 to i32
    %c0_i32_0 = arith.constant 0 : i32
    %2 = arith.cmpi ne, %1, %c0_i32_0 : i32
    scf.if %2 {
      %cst_11 = arith.constant 0.000000e+00 : f32
      %13 = vector.broadcast %cst_11 : f32 to vector<512x128xf32>
      %c0_12 = arith.constant 0 : index
      %c0_13 = arith.constant 0 : index
      %14 = vector.load %arg9[%c0_12, %c0_13] : memref<512x128xf32, #tpu.memory_space<vmem>>, vector<512x128xf32>
      tpu.vector_store %arg9[%c0_12, %c0_13], %13 {strides = array<i32>} : memref<512x128xf32, #tpu.memory_space<vmem>>, vector<512x128xf32>,
    } else {
    }
    %c0 = arith.constant 0 : index
    %c0_1 = arith.constant 0 : index
    %3 = vector.load %arg9[%c0, %c0_1] : memref<512x128xf32, #tpu.memory_space<vmem>>, vector<512x128xf32>
    %c0_2 = arith.constant 0 : index
    %c0_3 = arith.constant 0 : index
    %c0_4 = arith.constant 0 : index
    %4 = vector.load %arg4[%c0_2, %c0_3, %c0_4] : memref<1x512x256xbf16, #tpu.memory_space<vmem>>, vector<1x512x256xbf16>
    %5 = vector.shape_cast %4 : vector<1x512x256xbf16> to vector<512x256xbf16>
    %c0_5 = arith.constant 0 : index
    %c0_6 = arith.constant 0 : index
    %6 = vector.load %arg5[%c0_5, %c0_6] : memref<256x128xbf16, #tpu.memory_space<vmem>>, vector<256x128xbf16>
    %cst = arith.constant dense<0.000000e+00> : vector<512x128xf32>
    %7 = tpu.matmul %5, %6, %cst {dimension_numbers = #tpu.dot_dimension_numbers<[1], [0], [0], [1], [0, 0, 1, 1], [], []>} : vector<512x256xbf16>, vector<256x128xbf16>, vector<512x128xf32> -> vector<512x128xf32>
    %8 = arith.addf %3, %7 : vector<512x128xf32>
    %c0_7 = arith.constant 0 : index
    %c0_8 = arith.constant 0 : index
    %9 = vector.load %arg9[%c0_7, %c0_8] : memref<512x128xf32, #tpu.memory_space<vmem>>, vector<512x128xf32>
    tpu.vector_store %arg9[%c0_7, %c0_8], %8 {strides = array<i32>} : memref<512x128xf32, #tpu.memory_space<vmem>>, vector<512x128xf32>,
    %c0_i32_9 = arith.constant 0 : i32
    %10 = arith.cmpi eq, %arg3, %c0_i32_9 : i32
    %11 = arith.extui %10 : i1 to i32
    %c0_i32_10 = arith.constant 0 : i32
    %12 = arith.cmpi ne, %11, %c0_i32_10 : i32
    scf.if %12 {
      %c0_11 = arith.constant 0 : index
      %c0_12 = arith.constant 0 : index
      %13 = vector.load %arg9[%c0_11, %c0_12] : memref<512x128xf32, #tpu.memory_space<vmem>>, vector<512x128xf32>
      %c0_13 = arith.constant 0 : index
      %c0_14 = arith.constant 0 : index
      %14 = vector.load %arg6[%c0_13, %c0_14] : memref<1x128xf32, #tpu.memory_space<vmem>>, vector<1x128xf32>
      %15 = vector.broadcast %14 : vector<1x128xf32> to vector<512x128xf32>
      %16 = arith.mulf %13, %15 : vector<512x128xf32>
      %c0_15 = arith.constant 0 : index
      %c0_16 = arith.constant 0 : index
      %17 = vector.load %arg7[%c0_15, %c0_16] : memref<1x128xf32, #tpu.memory_space<vmem>>, vector<1x128xf32>
      %18 = vector.broadcast %17 : vector<1x128xf32> to vector<512x128xf32>
      %19 = arith.addf %16, %18 : vector<512x128xf32>
      %cst_17 = arith.constant 0.000000e+00 : f32
      %20 = vector.broadcast %cst_17 : f32 to vector<512x128xf32>
      %21 = arith.maximumf %19, %20 : vector<512x128xf32>
      %22 = arith.truncf %21 : vector<512x128xf32> to vector<512x128xbf16>
      %c0_18 = arith.constant 0 : index
      %c0_19 = arith.constant 0 : index
      %c0_20 = arith.constant 0 : index
      %23 = vector.load %arg8[%c0_18, %c0_19, %c0_20] : memref<1x512x128xbf16, #tpu.memory_space<vmem>>, vector<1x512x128xbf16>
      %24 = vector.shape_cast %23 : vector<1x512x128xbf16> to vector<512x128xbf16>
      %25 = vector.shape_cast %22 : vector<512x128xbf16> to vector<1x512x128xbf16>
      tpu.vector_store %arg8[%c0_18, %c0_19, %c0_20], %25 {strides = array<i32>} : memref<1x512x128xbf16, #tpu.memory_space<vmem>>, vector<1x512x128xbf16>,
    } else {
    }
    return
  }
  func.func @transform_0(%arg0: i32, %arg1: i32, %arg2: i32, %arg3: i32) -> (i32, i32, i32) {
    %c0_i32 = arith.constant 0 : i32
    return %arg0, %arg1, %arg3 : i32, i32, i32
  }
  func.func @transform_1(%arg0: i32, %arg1: i32, %arg2: i32, %arg3: i32) -> (i32, i32) {
    %c0_i32 = arith.constant 0 : i32
    return %arg3, %arg2 : i32, i32
  }
  func.func @transform_2(%arg0: i32, %arg1: i32, %arg2: i32, %arg3: i32) -> (i32, i32) {
    %c0_i32 = arith.constant 0 : i32
    %c0_i32_0 = arith.constant 0 : i32
    return %c0_i32, %arg2 : i32, i32
  }
  func.func @transform_3(%arg0: i32, %arg1: i32, %arg2: i32, %arg3: i32) -> (i32, i32) {
    %c0_i32 = arith.constant 0 : i32
    %c0_i32_0 = arith.constant 0 : i32
    return %c0_i32, %arg2 : i32, i32
  }
  func.func @transform_4(%arg0: i32, %arg1: i32, %arg2: i32, %arg3: i32) -> (i32, i32, i32) {
    %c0_i32 = arith.constant 0 : i32
    return %arg0, %arg1, %arg2 : i32, i32, i32
  }
}

</mosaic_0001>

<llo_original>
// kernel: tpu_custom_call.1
$region0: #{tpu_custom_call.1}
  #allocation0 [shape = 'u32[]', space=smem, size = 0x4, offset = 0x4, fixed_abs, tag = 'smem constant byte address 0x4 - core index']
  #allocation1 [shape = 'u32[144,128]{1,0:T(1,128)}', space=vmem, size = 0x12000, scoped, tag = 'internal scratch']
  #allocation2 [shape = 'f32[512,128]{1,0:T(8,128)}', space=vmem, size = 0x40000, scoped, tag = 'scratch operand']
  %s0 = inlined_call_operand.hbm [shape: bf16[1,1024,256], index: 0, kind: input, shape index: {}]
  %s1 = inlined_call_operand.hbm [shape: bf16[256,128], index: 1, kind: input, shape index: {}]
  %s2 = inlined_call_operand.vmem [shape: f32[1,128], index: 2, kind: input, shape index: {}]
  %s3 = inlined_call_operand.vmem [shape: f32[1,128], index: 3, kind: input, shape index: {}]
  %s4 = inlined_call_operand.hbm [shape: bf16[1,1024,128], index: 4, kind: output, shape index: {}]
  %s5 = sld [smem:[#allocation0]]
  $region65: #{tpu_custom_call.1} parent=0
    _
  %s7 = ssub.s32 1, %s5
  %s8 = scalar_select 0, %s7, %s5
  $region1: #{tpu_custom_call.1} parent=0
    #allocation3 [shape = 'u8[524288]{0}', space=vmem, size = 0x80000, scoped, tag = 'input window, operand 0']
    #allocation4 [shape = 's32[2]{0}', space=sflag, size = 0x8, scoped, tag = 'scoped memory for tpu_custom_call.1']
    #allocation5 [shape = 's32[2]{0}', space=sflag, size = 0x8, scoped, tag = 'scoped memory for tpu_custom_call.1']
    #allocation6 [shape = 'u8[65536]{0}', space=vmem, size = 0x10000, scoped, tag = 'input window, operand 1, single buffered']
    #allocation7 [shape = 's32[1]{0}', space=sflag, size = 0x4, scoped, tag = 'scoped memory for tpu_custom_call.1']
    #allocation8 [shape = 'u8[262144]{0}', space=vmem, size = 0x40000, scoped, tag = 'output window, operand 0']
    %9 = vsyncpa [#allocation4], 0
    %s10 = scalar_lea.sflag [#allocation4], 1
    %11 = vsyncpa %s10, 0
    %12 = vsyncpa [#allocation7], 0
    %13 = vsyncpa [#allocation5], 0
    %s14 = scalar_lea.sflag [#allocation5], 1
    %15 = vsyncpa %s14, 0
    loop: start=0, step=1, limit=4
    $region2: #{tpu_custom_call.1} parent=1 // loop_pre_header
      _
    $region3: #{tpu_custom_call.1} parent=1 // loop_header
      %s17 = sphi 0, %s21
      %p18 = scmp.ge.s32.totalorder %s17, 4
      %s24 = sphi 0, %s50
      %s25 = sphi 0, %s46
      %s26 = sphi 0, %s42
      %s27 = sphi 0, %s38
      %s28 = sphi 0, %s24
      %s29 = sphi 0, %s25
      %s30 = sphi 0, %s26
      %s31 = sphi 0, %s27
      %s32 = sphi 0, %s28
      %s33 = sphi 0, %s29
      %s34 = sphi 0, %s30
      %s35 = sphi 0, %s31
      %s57 = sphi 0, %s59
      %s60 = sphi 0, %s57
      %s61 = sphi 0, %s60
      %s77 = sphi 0, %s61
      %s85 = sphi 0, %s87
      %s88 = sphi 0, %s85
      %s89 = sphi 0, %s88
      %s105 = sphi 0, %s89
      %s111 = sphi 0, %s113
      %s114 = sphi 0, %s111
      %s115 = sphi 0, %s114
      %s131 = sphi 0, %s115
      %s137 = sphi 0, %s139
      %s140 = sphi 0, %s137
      %s141 = sphi 0, %s140
      %s157 = sphi 0, %s141
      %s167 = sphi 0, %s169
      %s170 = sphi 0, %s167
      %s171 = sphi 0, %s170
      %s187 = sphi 0, %s171
    $region4: #{tpu_custom_call.1} parent=1 // loop_header_branch
      %20 = sbr.rel (%p18) target = $region8
    $region5: #{tpu_custom_call.1} parent=1 // loop_body
      %s22 = ssub.s32 %s17, 1
      %s23 = ssub.s32 %s17, 2
      %s36 = sadd.s32 1, %s27
      %p37 = scmp.ge.s32.totalorder %s36, 1
      %s38 = scalar_select %p37, 0, %s36
      %s39 = sadd.s32 1, %s26
      %s40 = scalar_select %p37, %s39, %s26
      %p41 = scmp.ge.s32.totalorder %s40, 1
      %s42 = scalar_select %p41, 0, %s40
      %s43 = sadd.s32 1, %s25
      %s44 = scalar_select %p41, %s43, %s25
      %p45 = scmp.ge.s32.totalorder %s44, 2
      %s46 = scalar_select %p45, 0, %s44
      %s47 = sadd.s32 1, %s24
      %s48 = scalar_select %p45, %s47, %s24
      %p49 = scmp.ge.s32.totalorder %s48, 1
      %s50 = scalar_select %p49, 0, %s48
      %s51 = ssub.s32 %s24, %s50
      %s52 = ssub.s32 %s25, %s46
      %s53 = sor.u32 %s51, %s52
      %s54 = ssub.s32 %s27, %s38
      %s55 = sor.u32 %s53, %s54
      %p56 = scmp.eq.s32.totalorder %s55, 0
      %s58 = sadd.s32 %s57, 1
      %s59 = scalar_select %p56, %s57, %s58
      %p62 = pneg %p56
      %p63 = scmp.eq.s32.totalorder %s17, 1
      %p64 = por %p62, %p63
      %p65 = scmp.ne.s32.totalorder %s57, %s60
      %p66 = scmp.eq.s32.totalorder %s17, 0
      %p67 = por %p65, %p66
      %p68 = scmp.ne.s32.totalorder %s57, %s60
      %p69 = scmp.eq.s32.totalorder %s22, 1
      %p70 = por %p68, %p69
      %p71 = scmp.ne.s32.totalorder %s60, %s61
      %p72 = scmp.eq.s32.totalorder %s22, 0
      %p73 = por %p71, %p72
      %p74 = scmp.ne.s32.totalorder %s60, %s61
      %p75 = scmp.eq.s32.totalorder %s23, 1
      %p76 = por %p74, %p75
      %p78 = scmp.ne.s32.totalorder %s61, %s77
      %p79 = scmp.eq.s32.totalorder %s23, 0
      %p80 = por %p78, %p79
      %s81 = ssub.s32 %s27, %s38
      %s82 = ssub.s32 %s26, %s42
      %s83 = sor.u32 %s81, %s82
      %p84 = scmp.eq.s32.totalorder %s83, 0
      %s86 = sadd.s32 %s85, 1
      %s87 = scalar_select %p84, %s85, %s86
      %p90 = pneg %p84
      %p91 = scmp.eq.s32.totalorder %s17, 1
      %p92 = por %p90, %p91
      %p93 = scmp.ne.s32.totalorder %s85, %s88
      %p94 = scmp.eq.s32.totalorder %s17, 0
      %p95 = por %p93, %p94
      %p96 = scmp.ne.s32.totalorder %s85, %s88
      %p97 = scmp.eq.s32.totalorder %s22, 1
      %p98 = por %p96, %p97
      %p99 = scmp.ne.s32.totalorder %s88, %s89
      %p100 = scmp.eq.s32.totalorder %s22, 0
      %p101 = por %p99, %p100
      %p102 = scmp.ne.s32.totalorder %s88, %s89
      %p103 = scmp.eq.s32.totalorder %s23, 1
      %p104 = por %p102, %p103
      %p106 = scmp.ne.s32.totalorder %s89, %s105
      %p107 = scmp.eq.s32.totalorder %s23, 0
      %p108 = por %p106, %p107
      %s109 = ssub.s32 %s26, %s42
      %p110 = scmp.eq.s32.totalorder %s109, 0
      %s112 = sadd.s32 %s111, 1
      %s113 = scalar_select %p110, %s111, %s112
      %p116 = pneg %p110
      %p117 = scmp.eq.s32.totalorder %s17, 1
      %p118 = por %p116, %p117
      %p119 = scmp.ne.s32.totalorder %s111, %s114
      %p120 = scmp.eq.s32.totalorder %s17, 0
      %p121 = por %p119, %p120
      %p122 = scmp.ne.s32.totalorder %s111, %s114
      %p123 = scmp.eq.s32.totalorder %s22, 1
      %p124 = por %p122, %p123
      %p125 = scmp.ne.s32.totalorder %s114, %s115
      %p126 = scmp.eq.s32.totalorder %s22, 0
      %p127 = por %p125, %p126
      %p128 = scmp.ne.s32.totalorder %s114, %s115
      %p129 = scmp.eq.s32.totalorder %s23, 1
      %p130 = por %p128, %p129
      %p132 = scmp.ne.s32.totalorder %s115, %s131
      %p133 = scmp.eq.s32.totalorder %s23, 0
      %p134 = por %p132, %p133
      %s135 = ssub.s32 %s26, %s42
      %p136 = scmp.eq.s32.totalorder %s135, 0
      %s138 = sadd.s32 %s137, 1
      %s139 = scalar_select %p136, %s137, %s138
      %p142 = pneg %p136
      %p143 = scmp.eq.s32.totalorder %s17, 1
      %p144 = por %p142, %p143
      %p145 = scmp.ne.s32.totalorder %s137, %s140
      %p146 = scmp.eq.s32.totalorder %s17, 0
      %p147 = por %p145, %p146
      %p148 = scmp.ne.s32.totalorder %s137, %s140
      %p149 = scmp.eq.s32.totalorder %s22, 1
      %p150 = por %p148, %p149
      %p151 = scmp.ne.s32.totalorder %s140, %s141
      %p152 = scmp.eq.s32.totalorder %s22, 0
      %p153 = por %p151, %p152
      %p154 = scmp.ne.s32.totalorder %s140, %s141
      %p155 = scmp.eq.s32.totalorder %s23, 1
      %p156 = por %p154, %p155
      %p158 = scmp.ne.s32.totalorder %s141, %s157
      %p159 = scmp.eq.s32.totalorder %s23, 0
      %p160 = por %p158, %p159
      %s161 = ssub.s32 %s24, %s50
      %s162 = ssub.s32 %s25, %s46
      %s163 = sor.u32 %s161, %s162
      %s164 = ssub.s32 %s26, %s42
      %s165 = sor.u32 %s163, %s164
      %p166 = scmp.eq.s32.totalorder %s165, 0
      %s168 = sadd.s32 %s167, 1
      %s169 = scalar_select %p166, %s167, %s168
      %p172 = pneg %p166
      %p173 = scmp.eq.s32.totalorder %s17, 1
      %p174 = por %p172, %p173
      %p175 = scmp.ne.s32.totalorder %s167, %s170
      %p176 = scmp.eq.s32.totalorder %s17, 0
      %p177 = por %p175, %p176
      %p178 = scmp.ne.s32.totalorder %s167, %s170
      %p179 = scmp.eq.s32.totalorder %s22, 1
      %p180 = por %p178, %p179
      %p181 = scmp.ne.s32.totalorder %s170, %s171
      %p182 = scmp.eq.s32.totalorder %s22, 0
      %p183 = por %p181, %p182
      %p184 = scmp.ne.s32.totalorder %s170, %s171
      %p185 = scmp.eq.s32.totalorder %s23, 1
      %p186 = por %p184, %p185
      %p188 = scmp.ne.s32.totalorder %s171, %s187
      %p189 = scmp.eq.s32.totalorder %s23, 0
      %p190 = por %p188, %p189
      %p191 = scmp.le.s32.totalorder 1, %s17
      %p192 = scmp.lt.s32.totalorder %s17, 3
      %p193 = pnand %p191, %p192
      %p194 = pneg %p193
      // Predicated region
      $region9: #{tpu_custom_call.1} parent=5 // pred_check
        _
      $region10: #{tpu_custom_call.1} parent=5 // pred_check_branch
        %196 = sbr.rel (%p193) target = $region12
      $region11: #{tpu_custom_call.1} parent=5 // pred_region
        %s197 = ssub.s32 %s17, 1
        // Predicated region
        $region13: #{tpu_custom_call.1} parent=11 // pred_check
          %p198 = pneg %p101
        $region14: #{tpu_custom_call.1} parent=11 // pred_check_branch
          %200 = sbr.rel (%p198) target = $region16
        $region15: #{tpu_custom_call.1} parent=11 // pred_region
          %s201 = smul.u32 32, %s31
          %s203 = ssub.s32 2048, 2048
          %204 = vsyncadd [#allocation7], %s203
          %s205 = sadd.s32 %s30, %s201
          %s206 = smul.addr %s205, 64
          %s207 = scalar_lea.hbm %s1, %s206
          %s208 = sshll.u32 [#allocation6], 4
          %s209 = int_to_ptr.vmem [resolvable:$true] %s208
          %214 = dma.hbm_to_vmem [thread:$0]  %s207, 2048, %s209, [#allocation7], 64, 64, 4
        $region16: #{tpu_custom_call.1} parent=11 // pred_fallthru
          _
        // Predicated region
        $region17: #{tpu_custom_call.1} parent=11 // pred_check
          %p215 = pneg %p127
        $region18: #{tpu_custom_call.1} parent=11 // pred_check_branch
          %217 = sbr.rel (%p215) target = $region20
        $region19: #{tpu_custom_call.1} parent=11 // pred_region
          %p218 = scmp.lt.s32.totalorder %s30, 0
          %s219 = scalar_select %p218, %s30, 0
          %s220 = scalar_lea.vmem %s2, %s219
        $region20: #{tpu_custom_call.1} parent=11 // pred_fallthru
          _
        // Predicated region
        $region21: #{tpu_custom_call.1} parent=11 // pred_check
          %p221 = pneg %p153
        $region22: #{tpu_custom_call.1} parent=11 // pred_check_branch
          %223 = sbr.rel (%p221) target = $region24
        $region23: #{tpu_custom_call.1} parent=11 // pred_region
          %p224 = scmp.lt.s32.totalorder %s30, 0
          %s225 = scalar_select %p224, %s30, 0
          %s226 = scalar_lea.vmem %s3, %s225
        $region24: #{tpu_custom_call.1} parent=11 // pred_fallthru
          _
      $region12: #{tpu_custom_call.1} parent=5 // pred_fallthru
        _
      %p227 = scmp.lt.s32.totalorder %s17, 2
      // Predicated region
      $region25: #{tpu_custom_call.1} parent=5 // pred_check
        %p228 = pneg %p227
      $region26: #{tpu_custom_call.1} parent=5 // pred_check_branch
        %230 = sbr.rel (%p228) target = $region28
      $region27: #{tpu_custom_call.1} parent=5 // pred_region
        // Predicated region
        $region29: #{tpu_custom_call.1} parent=27 // pred_check
          %p231 = pneg %p67
        $region30: #{tpu_custom_call.1} parent=27 // pred_check_branch
          %233 = sbr.rel (%p231) target = $region32
        $region31: #{tpu_custom_call.1} parent=27 // pred_region
          %s234 = sand.u32 %s57, 1
          %s235 = scalar_lea.sflag [#allocation4], %s234
          %s236 = sand.u32 %s57, 1
          %s237 = smul.addr %s236, 512
          %s238 = scalar_lea.vmem [#allocation3], %s237
          %s239 = smul.u32 64, %s25
          %s240 = smul.u32 2, %s27
          %s242 = ssub.s32 8192, 8192
          %243 = vsyncadd %s235, %s242
          %s244 = smul.addr %s239, 2
          %s245 = sadd.s32 %s240, %s244
          %s246 = smul.addr %s24, 256
          %s247 = sadd.s32 %s245, %s246
          %s248 = smul.addr %s247, 64
          %s249 = scalar_lea.hbm %s0, %s248
          %s250 = sshll.u32 %s238, 4
          %s251 = int_to_ptr.vmem [resolvable:$true] %s250
          %256 = dma.hbm_to_vmem [thread:$0]  %s249, 8192, %s251, %s235, 128, 128, 8
        $region32: #{tpu_custom_call.1} parent=27 // pred_fallthru
          _
      $region28: #{tpu_custom_call.1} parent=5 // pred_fallthru
        _
      %p257 = scmp.le.s32.totalorder 1, %s17
      %p258 = scmp.lt.s32.totalorder %s17, 3
      %p259 = pnand %p257, %p258
      %p260 = pneg %p259
      // Predicated region
      $region33: #{tpu_custom_call.1} parent=5 // pred_check
        _
      $region34: #{tpu_custom_call.1} parent=5 // pred_check_branch
        %262 = sbr.rel (%p259) target = $region36
      $region35: #{tpu_custom_call.1} parent=5 // pred_region
        %s263 = ssub.s32 %s17, 1
        %s264 = sand.u32 %s60, 1
        %s265 = scalar_lea.sflag [#allocation4], %s264
        %s266 = sand.u32 %s60, 1
        %s267 = smul.addr %s266, 512
        %s268 = scalar_lea.vmem [#allocation3], %s267
        // Predicated region
        $region37: #{tpu_custom_call.1} parent=35 // pred_check
          %p269 = pneg %p73
        $region38: #{tpu_custom_call.1} parent=35 // pred_check_branch
          %271 = sbr.rel (%p269) target = $region40
        $region39: #{tpu_custom_call.1} parent=35 // pred_region
          %272 = dma.done %s265, 8192
        $region40: #{tpu_custom_call.1} parent=35 // pred_fallthru
          _
        // Predicated region
        $region41: #{tpu_custom_call.1} parent=35 // pred_check
          %p273 = pneg %p101
        $region42: #{tpu_custom_call.1} parent=35 // pred_check_branch
          %275 = sbr.rel (%p273) target = $region44
        $region43: #{tpu_custom_call.1} parent=35 // pred_region
          %276 = dma.done [#allocation7], 2048
        $region44: #{tpu_custom_call.1} parent=35 // pred_fallthru
          _
        %s277 = sand.u32 %s60, 1
        %s278 = scalar_lea.sflag [#allocation4], %s277
        %s279 = sand.u32 %s60, 1
        %s280 = smul.addr %s279, 512
        %s281 = scalar_lea.vmem [#allocation3], %s280
        %p282 = pneg %p73
        %p283 = pneg %p70
        %p284 = pneg %p101
        %p285 = pneg %p98
        %p286 = scmp.lt.s32.totalorder %s30, 0
        %s287 = scalar_select %p286, %s30, 0
        %s288 = scalar_lea.vmem %s2, %s287
        %p289 = pneg %p127
        %p290 = pneg %p124
        %p291 = scmp.lt.s32.totalorder %s30, 0
        %s292 = scalar_select %p291, %s30, 0
        %s293 = scalar_lea.vmem %s3, %s292
        %p294 = pneg %p153
        %p295 = pneg %p150
        %p296 = pneg %p183
        %p297 = pneg %p180
        %s298 = sand.u32 %s170, 1
        %s299 = scalar_lea.sflag [#allocation5], %s298
        %s300 = sand.u32 %s170, 1
        %s301 = smul.addr %s300, 256
        %s302 = scalar_lea.vmem [#allocation8], %s301
        %s303 = smul.u32 64, %s29
        %s304 = smul.u32 2, %s31
        %s305 = smul.u32 32, %s31
        %p306 = scmp.lt.s32.totalorder %s30, 0
        %s307 = scalar_select %p306, %s30, 0
        %s308 = scalar_lea.vmem %s2, %s307
        %p309 = scmp.lt.s32.totalorder %s30, 0
        %s310 = scalar_select %p309, %s30, 0
        %s311 = scalar_lea.vmem %s3, %s310
        %s312 = smul.u32 64, %s29
        %p314 = scmp.eq.s32.totalorder %s31, 0
        // Predicated region
        $region45: #{tpu_custom_call.1} parent=35 // pred_check
          %p315 = pneg %p314
        $region46: #{tpu_custom_call.1} parent=35 // pred_check_branch
          %317 = sbr.rel (%p315) target = $region48
        $region47: #{tpu_custom_call.1} parent=35 // pred_region
          %318 = vst [vmem:[#allocation2] sm:$0xff] 0.0
          %319 = vst [vmem:[#allocation2 + $0x8] sm:$0xff] 0.0
          %320 = vst [vmem:[#allocation2 + $0x10] sm:$0xff] 0.0
          %321 = vst [vmem:[#allocation2 + $0x18] sm:$0xff] 0.0
          %322 = vst [vmem:[#allocation2 + $0x20] sm:$0xff] 0.0
          %323 = vst [vmem:[#allocation2 + $0x28] sm:$0xff] 0.0
          %324 = vst [vmem:[#allocation2 + $0x30] sm:$0xff] 0.0
          %325 = vst [vmem:[#allocation2 + $0x38] sm:$0xff] 0.0
          %326 = vst [vmem:[#allocation2 + $0x40] sm:$0xff] 0.0
          %327 = vst [vmem:[#allocation2 + $0x48] sm:$0xff] 0.0
          %328 = vst [vmem:[#allocation2 + $0x50] sm:$0xff] 0.0
          %329 = vst [vmem:[#allocation2 + $0x58] sm:$0xff] 0.0
          %330 = vst [vmem:[#allocation2 + $0x60] sm:$0xff] 0.0
          %331 = vst [vmem:[#allocation2 + $0x68] sm:$0xff] 0.0
          %332 = vst [vmem:[#allocation2 + $0x70] sm:$0xff] 0.0
          %333 = vst [vmem:[#allocation2 + $0x78] sm:$0xff] 0.0
          %334 = vst [vmem:[#allocation2 + $0x80] sm:$0xff] 0.0
          %335 = vst [vmem:[#allocation2 + $0x88] sm:$0xff] 0.0
          %336 = vst [vmem:[#allocation2 + $0x90] sm:$0xff] 0.0
          %337 = vst [vmem:[#allocation2 + $0x98] sm:$0xff] 0.0
          %338 = vst [vmem:[#allocation2 + $0xa0] sm:$0xff] 0.0
          %339 = vst [vmem:[#allocation2 + $0xa8] sm:$0xff] 0.0
          %340 = vst [vmem:[#allocation2 + $0xb0] sm:$0xff] 0.0
          %341 = vst [vmem:[#allocation2 + $0xb8] sm:$0xff] 0.0
          %342 = vst [vmem:[#allocation2 + $0xc0] sm:$0xff] 0.0
          %343 = vst [vmem:[#allocation2 + $0xc8] sm:$0xff] 0.0
          %344 = vst [vmem:[#allocation2 + $0xd0] sm:$0xff] 0.0
          %345 = vst [vmem:[#allocation2 + $0xd8] sm:$0xff] 0.0
          %346 = vst [vmem:[#allocation2 + $0xe0] sm:$0xff] 0.0
          %347 = vst [vmem:[#allocation2 + $0xe8] sm:$0xff] 0.0
          %348 = vst [vmem:[#allocation2 + $0xf0] sm:$0xff] 0.0
          %349 = vst [vmem:[#allocation2 + $0xf8] sm:$0xff] 0.0
          %350 = vst [vmem:[#allocation2 + $0x100] sm:$0xff] 0.0
          %351 = vst [vmem:[#allocation2 + $0x108] sm:$0xff] 0.0
          %352 = vst [vmem:[#allocation2 + $0x110] sm:$0xff] 0.0
          %353 = vst [vmem:[#allocation2 + $0x118] sm:$0xff] 0.0
          %354 = vst [vmem:[#allocation2 + $0x120] sm:$0xff] 0.0
          %355 = vst [vmem:[#allocation2 + $0x128] sm:$0xff] 0.0
          %356 = vst [vmem:[#allocation2 + $0x130] sm:$0xff] 0.0
          %357 = vst [vmem:[#allocation2 + $0x138] sm:$0xff] 0.0
          %358 = vst [vmem:[#allocation2 + $0x140] sm:$0xff] 0.0
          %359 = vst [vmem:[#allocation2 + $0x148] sm:$0xff] 0.0
          %360 = vst [vmem:[#allocation2 + $0x150] sm:$0xff] 0.0
          %361 = vst [vmem:[#allocation2 + $0x158] sm:$0xff] 0.0
          %362 = vst [vmem:[#allocation2 + $0x160] sm:$0xff] 0.0
          %363 = vst [vmem:[#allocation2 + $0x168] sm:$0xff] 0.0
          %364 = vst [vmem:[#allocation2 + $0x170] sm:$0xff] 0.0
          %365 = vst [vmem:[#allocation2 + $0x178] sm:$0xff] 0.0
          %366 = vst [vmem:[#allocation2 + $0x180] sm:$0xff] 0.0
          %367 = vst [vmem:[#allocation2 + $0x188] sm:$0xff] 0.0
          %368 = vst [vmem:[#allocation2 + $0x190] sm:$0xff] 0.0
          %369 = vst [vmem:[#allocation2 + $0x198] sm:$0xff] 0.0
          %370 = vst [vmem:[#allocation2 + $0x1a0] sm:$0xff] 0.0
          %371 = vst [vmem:[#allocation2 + $0x1a8] sm:$0xff] 0.0
          %372 = vst [vmem:[#allocation2 + $0x1b0] sm:$0xff] 0.0
          %373 = vst [vmem:[#allocation2 + $0x1b8] sm:$0xff] 0.0
          %374 = vst [vmem:[#allocation2 + $0x1c0] sm:$0xff] 0.0
          %375 = vst [vmem:[#allocation2 + $0x1c8] sm:$0xff] 0.0
          %376 = vst [vmem:[#allocation2 + $0x1d0] sm:$0xff] 0.0
          %377 = vst [vmem:[#allocation2 + $0x1d8] sm:$0xff] 0.0
          %378 = vst [vmem:[#allocation2 + $0x1e0] sm:$0xff] 0.0
          %379 = vst [vmem:[#allocation2 + $0x1e8] sm:$0xff] 0.0
          %380 = vst [vmem:[#allocation2 + $0x1f0] sm:$0xff] 0.0
          %381 = vst [vmem:[#allocation2 + $0x1f8] sm:$0xff] 0.0
        $region48: #{tpu_custom_call.1} parent=35 // pred_fallthru
          _
        %v382 = vld [vmem:[#allocation2] sm:$0xff]
        %v383 = vld [vmem:[#allocation2 + $0x8] sm:$0xff]
        %v384 = vld [vmem:[#allocation2 + $0x10] sm:$0xff]
        %v385 = vld [vmem:[#allocation2 + $0x18] sm:$0xff]
        %v386 = vld [vmem:[#allocation2 + $0x20] sm:$0xff]
        %v387 = vld [vmem:[#allocation2 + $0x28] sm:$0xff]
        %v388 = vld [vmem:[#allocation2 + $0x30] sm:$0xff]
        %v389 = vld [vmem:[#allocation2 + $0x38] sm:$0xff]
        %v390 = vld [vmem:[#allocation2 + $0x40] sm:$0xff]
        %v391 = vld [vmem:[#allocation2 + $0x48] sm:$0xff]
        %v392 = vld [vmem:[#allocation2 + $0x50] sm:$0xff]
        %v393 = vld [vmem:[#allocation2 + $0x58] sm:$0xff]
        %v394 = vld [vmem:[#allocation2 + $0x60] sm:$0xff]
        %v395 = vld [vmem:[#allocation2 + $0x68] sm:$0xff]
        %v396 = vld [vmem:[#allocation2 + $0x70] sm:$0xff]
        %v397 = vld [vmem:[#allocation2 + $0x78] sm:$0xff]
        %v398 = vld [vmem:[#allocation2 + $0x80] sm:$0xff]
        %v399 = vld [vmem:[#allocation2 + $0x88] sm:$0xff]
        %v400 = vld [vmem:[#allocation2 + $0x90] sm:$0xff]
        %v401 = vld [vmem:[#allocation2 + $0x98] sm:$0xff]
        %v402 = vld [vmem:[#allocation2 + $0xa0] sm:$0xff]
        %v403 = vld [vmem:[#allocation2 + $0xa8] sm:$0xff]
        %v404 = vld [vmem:[#allocation2 + $0xb0] sm:$0xff]
        %v405 = vld [vmem:[#allocation2 + $0xb8] sm:$0xff]
        %v406 = vld [vmem:[#allocation2 + $0xc0] sm:$0xff]
        %v407 = vld [vmem:[#allocation2 + $0xc8] sm:$0xff]
        %v408 = vld [vmem:[#allocation2 + $0xd0] sm:$0xff]
        %v409 = vld [vmem:[#allocation2 + $0xd8] sm:$0xff]
        %v410 = vld [vmem:[#allocation2 + $0xe0] sm:$0xff]
        %v411 = vld [vmem:[#allocation2 + $0xe8] sm:$0xff]
        %v412 = vld [vmem:[#allocation2 + $0xf0] sm:$0xff]
        %v413 = vld [vmem:[#allocation2 + $0xf8] sm:$0xff]
        %v414 = vld [vmem:[#allocation2 + $0x100] sm:$0xff]
        %v415 = vld [vmem:[#allocation2 + $0x108] sm:$0xff]
        %v416 = vld [vmem:[#allocation2 + $0x110] sm:$0xff]
        %v417 = vld [vmem:[#allocation2 + $0x118] sm:$0xff]
        %v418 = vld [vmem:[#allocation2 + $0x120] sm:$0xff]
        %v419 = vld [vmem:[#allocation2 + $0x128] sm:$0xff]
        %v420 = vld [vmem:[#allocation2 + $0x130] sm:$0xff]
        %v421 = vld [vmem:[#allocation2 + $0x138] sm:$0xff]
        %v422 = vld [vmem:[#allocation2 + $0x140] sm:$0xff]
        %v423 = vld [vmem:[#allocation2 + $0x148] sm:$0xff]
        %v424 = vld [vmem:[#allocation2 + $0x150] sm:$0xff]
        %v425 = vld [vmem:[#allocation2 + $0x158] sm:$0xff]
        %v426 = vld [vmem:[#allocation2 + $0x160] sm:$0xff]
        %v427 = vld [vmem:[#allocation2 + $0x168] sm:$0xff]
        %v428 = vld [vmem:[#allocation2 + $0x170] sm:$0xff]
        %v429 = vld [vmem:[#allocation2 + $0x178] sm:$0xff]
        %v430 = vld [vmem:[#allocation2 + $0x180] sm:$0xff]
        %v431 = vld [vmem:[#allocation2 + $0x188] sm:$0xff]
        %v432 = vld [vmem:[#allocation2 + $0x190] sm:$0xff]
        %v433 = vld [vmem:[#allocation2 + $0x198] sm:$0xff]
        %v434 = vld [vmem:[#allocation2 + $0x1a0] sm:$0xff]
        %v435 = vld [vmem:[#allocation2 + $0x1a8] sm:$0xff]
        %v436 = vld [vmem:[#allocation2 + $0x1b0] sm:$0xff]
        %v437 = vld [vmem:[#allocation2 + $0x1b8] sm:$0xff]
        %v438 = vld [vmem:[#allocation2 + $0x1c0] sm:$0xff]
        %v439 = vld [vmem:[#allocation2 + $0x1c8] sm:$0xff]
        %v440 = vld [vmem:[#allocation2 + $0x1d0] sm:$0xff]
        %v441 = vld [vmem:[#allocation2 + $0x1d8] sm:$0xff]
        %v442 = vld [vmem:[#allocation2 + $0x1e0] sm:$0xff]
        %v443 = vld [vmem:[#allocation2 + $0x1e8] sm:$0xff]
        %v444 = vld [vmem:[#allocation2 + $0x1f0] sm:$0xff]
        %v445 = vld [vmem:[#allocation2 + $0x1f8] sm:$0xff]
        %v446 = vld [vmem:[%s268] sm:$0xff]
        %v447 = vld [vmem:[%s268 + $0x8] sm:$0xff]
        %v448 = vld [vmem:[%s268 + $0x10] sm:$0xff]
        %v449 = vld [vmem:[%s268 + $0x18] sm:$0xff]
        %v450 = vld [vmem:[%s268 + $0x20] sm:$0xff]
        %v451 = vld [vmem:[%s268 + $0x28] sm:$0xff]
        %v452 = vld [vmem:[%s268 + $0x30] sm:$0xff]
        %v453 = vld [vmem:[%s268 + $0x38] sm:$0xff]
        %v454 = vld [vmem:[%s268 + $0x40] sm:$0xff]
        %v455 = vld [vmem:[%s268 + $0x48] sm:$0xff]
        %v456 = vld [vmem:[%s268 + $0x50] sm:$0xff]
        %v457 = vld [vmem:[%s268 + $0x58] sm:$0xff]
        %v458 = vld [vmem:[%s268 + $0x60] sm:$0xff]
        %v459 = vld [vmem:[%s268 + $0x68] sm:$0xff]
        %v460 = vld [vmem:[%s268 + $0x70] sm:$0xff]
        %v461 = vld [vmem:[%s268 + $0x78] sm:$0xff]
        %v462 = vld [vmem:[%s268 + $0x80] sm:$0xff]
        %v463 = vld [vmem:[%s268 + $0x88] sm:$0xff]
        %v464 = vld [vmem:[%s268 + $0x90] sm:$0xff]
        %v465 = vld [vmem:[%s268 + $0x98] sm:$0xff]
        %v466 = vld [vmem:[%s268 + $0xa0] sm:$0xff]
        %v467 = vld [vmem:[%s268 + $0xa8] sm:$0xff]
        %v468 = vld [vmem:[%s268 + $0xb0] sm:$0xff]
        %v469 = vld [vmem:[%s268 + $0xb8] sm:$0xff]
        %v470 = vld [vmem:[%s268 + $0xc0] sm:$0xff]
        %v471 = vld [vmem:[%s268 + $0xc8] sm:$0xff]
        %v472 = vld [vmem:[%s268 + $0xd0] sm:$0xff]
        %v473 = vld [vmem:[%s268 + $0xd8] sm:$0xff]
        %v474 = vld [vmem:[%s268 + $0xe0] sm:$0xff]
        %v475 = vld [vmem:[%s268 + $0xe8] sm:$0xff]
        %v476 = vld [vmem:[%s268 + $0xf0] sm:$0xff]
        %v477 = vld [vmem:[%s268 + $0xf8] sm:$0xff]
        %v478 = vld [vmem:[%s268 + $0x100] sm:$0xff]
        %v479 = vld [vmem:[%s268 + $0x108] sm:$0xff]
        %v480 = vld [vmem:[%s268 + $0x110] sm:$0xff]
        %v481 = vld [vmem:[%s268 + $0x118] sm:$0xff]
        %v482 = vld [vmem:[%s268 + $0x120] sm:$0xff]
        %v483 = vld [vmem:[%s268 + $0x128] sm:$0xff]
        %v484 = vld [vmem:[%s268 + $0x130] sm:$0xff]
        %v485 = vld [vmem:[%s268 + $0x138] sm:$0xff]
        %v486 = vld [vmem:[%s268 + $0x140] sm:$0xff]
        %v487 = vld [vmem:[%s268 + $0x148] sm:$0xff]
        %v488 = vld [vmem:[%s268 + $0x150] sm:$0xff]
        %v489 = vld [vmem:[%s268 + $0x158] sm:$0xff]
        %v490 = vld [vmem:[%s268 + $0x160] sm:$0xff]
        %v491 = vld [vmem:[%s268 + $0x168] sm:$0xff]
        %v492 = vld [vmem:[%s268 + $0x170] sm:$0xff]
        %v493 = vld [vmem:[%s268 + $0x178] sm:$0xff]
        %v494 = vld [vmem:[%s268 + $0x180] sm:$0xff]
        %v495 = vld [vmem:[%s268 + $0x188] sm:$0xff]
        %v496 = vld [vmem:[%s268 + $0x190] sm:$0xff]
        %v497 = vld [vmem:[%s268 + $0x198] sm:$0xff]
        %v498 = vld [vmem:[%s268 + $0x1a0] sm:$0xff]
        %v499 = vld [vmem:[%s268 + $0x1a8] sm:$0xff]
        %v500 = vld [vmem:[%s268 + $0x1b0] sm:$0xff]
        %v501 = vld [vmem:[%s268 + $0x1b8] sm:$0xff]
        %v502 = vld [vmem:[%s268 + $0x1c0] sm:$0xff]
        %v503 = vld [vmem:[%s268 + $0x1c8] sm:$0xff]
        %v504 = vld [vmem:[%s268 + $0x1d0] sm:$0xff]
        %v505 = vld [vmem:[%s268 + $0x1d8] sm:$0xff]
        %v506 = vld [vmem:[%s268 + $0x1e0] sm:$0xff]
        %v507 = vld [vmem:[%s268 + $0x1e8] sm:$0xff]
        %v508 = vld [vmem:[%s268 + $0x1f0] sm:$0xff]
        %v509 = vld [vmem:[%s268 + $0x1f8] sm:$0xff]
        %v510 = vld [vmem:[#allocation6] sm:$0xf]
        %v511 = vld [vmem:[#allocation6 + $0x4] sm:$0xf]
        %v512 = vld [vmem:[#allocation6 + $0x8] sm:$0xf]
        %v513 = vld [vmem:[#allocation6 + $0xc] sm:$0xf]
        %v514 = vld [vmem:[#allocation6 + $0x10] sm:$0xf]
        %v515 = vld [vmem:[#allocation6 + $0x14] sm:$0xf]
        %v516 = vld [vmem:[#allocation6 + $0x18] sm:$0xf]
        %v517 = vld [vmem:[#allocation6 + $0x1c] sm:$0xf]
        %v518 = vld [vmem:[#allocation6 + $0x20] sm:$0xf]
        %v519 = vld [vmem:[#allocation6 + $0x24] sm:$0xf]
        %v520 = vld [vmem:[#allocation6 + $0x28] sm:$0xf]
        %v521 = vld [vmem:[#allocation6 + $0x2c] sm:$0xf]
        %v522 = vld [vmem:[#allocation6 + $0x30] sm:$0xf]
        %v523 = vld [vmem:[#allocation6 + $0x34] sm:$0xf]
        %v524 = vld [vmem:[#allocation6 + $0x38] sm:$0xf]
        %v525 = vld [vmem:[#allocation6 + $0x3c] sm:$0xf]
        %v526 = vld [vmem:[#allocation6 + $0x40] sm:$0xf]
        %v527 = vld [vmem:[#allocation6 + $0x44] sm:$0xf]
        %v528 = vld [vmem:[#allocation6 + $0x48] sm:$0xf]
        %v529 = vld [vmem:[#allocation6 + $0x4c] sm:$0xf]
        %v530 = vld [vmem:[#allocation6 + $0x50] sm:$0xf]
        %v531 = vld [vmem:[#allocation6 + $0x54] sm:$0xf]
        %v532 = vld [vmem:[#allocation6 + $0x58] sm:$0xf]
        %v533 = vld [vmem:[#allocation6 + $0x5c] sm:$0xf]
        %v534 = vld [vmem:[#allocation6 + $0x60] sm:$0xf]
        %v535 = vld [vmem:[#allocation6 + $0x64] sm:$0xf]
        %v536 = vld [vmem:[#allocation6 + $0x68] sm:$0xf]
        %v537 = vld [vmem:[#allocation6 + $0x6c] sm:$0xf]
        %v538 = vld [vmem:[#allocation6 + $0x70] sm:$0xf]
        %v539 = vld [vmem:[#allocation6 + $0x74] sm:$0xf]
        %v540 = vld [vmem:[#allocation6 + $0x78] sm:$0xf]
        %v541 = vld [vmem:[#allocation6 + $0x7c] sm:$0xf]
        %v606 = vunpack.c.l.b16 %v446
        %v607 = vunpack.c.h.b16 %v446
        %v608 = vunpack.c.l.b16 %v447
        %v609 = vunpack.c.h.b16 %v447
        %v610 = vunpack.c.l.b16 %v448
        %v611 = vunpack.c.h.b16 %v448
        %v612 = vunpack.c.l.b16 %v449
        %v613 = vunpack.c.h.b16 %v449
        %v614 = vunpack.c.l.b16 %v450
        %v615 = vunpack.c.h.b16 %v450
        %v616 = vunpack.c.l.b16 %v451
        %v617 = vunpack.c.h.b16 %v451
        %v618 = vunpack.c.l.b16 %v452
        %v619 = vunpack.c.h.b16 %v452
        %v620 = vunpack.c.l.b16 %v453
        %v621 = vunpack.c.h.b16 %v453
        %v622 = vunpack.c.l.b16 %v454
        %v623 = vunpack.c.h.b16 %v454
        %v624 = vunpack.c.l.b16 %v455
        %v625 = vunpack.c.h.b16 %v455
        %v626 = vunpack.c.l.b16 %v456
        %v627 = vunpack.c.h.b16 %v456
        %v628 = vunpack.c.l.b16 %v457
        %v629 = vunpack.c.h.b16 %v457
        %v630 = vunpack.c.l.b16 %v458
        %v631 = vunpack.c.h.b16 %v458
        %v632 = vunpack.c.l.b16 %v459
        %v633 = vunpack.c.h.b16 %v459
        %v634 = vunpack.c.l.b16 %v460
        %v635 = vunpack.c.h.b16 %v460
        %v636 = vunpack.c.l.b16 %v461
        %v637 = vunpack.c.h.b16 %v461
        %v638 = vunpack.c.l.b16 %v462
        %v639 = vunpack.c.h.b16 %v462
        %v640 = vunpack.c.l.b16 %v463
        %v641 = vunpack.c.h.b16 %v463
        %v642 = vunpack.c.l.b16 %v464
        %v643 = vunpack.c.h.b16 %v464
        %v644 = vunpack.c.l.b16 %v465
        %v645 = vunpack.c.h.b16 %v465
        %v646 = vunpack.c.l.b16 %v466
        %v647 = vunpack.c.h.b16 %v466
        %v648 = vunpack.c.l.b16 %v467
        %v649 = vunpack.c.h.b16 %v467
        %v650 = vunpack.c.l.b16 %v468
        %v651 = vunpack.c.h.b16 %v468
        %v652 = vunpack.c.l.b16 %v469
        %v653 = vunpack.c.h.b16 %v469
        %v654 = vunpack.c.l.b16 %v470
        %v655 = vunpack.c.h.b16 %v470
        %v656 = vunpack.c.l.b16 %v471
        %v657 = vunpack.c.h.b16 %v471
        %v658 = vunpack.c.l.b16 %v472
        %v659 = vunpack.c.h.b16 %v472
        %v660 = vunpack.c.l.b16 %v473
        %v661 = vunpack.c.h.b16 %v473
        %v662 = vunpack.c.l.b16 %v474
        %v663 = vunpack.c.h.b16 %v474
        %v664 = vunpack.c.l.b16 %v475
        %v665 = vunpack.c.h.b16 %v475
        %v666 = vunpack.c.l.b16 %v476
        %v667 = vunpack.c.h.b16 %v476
        %v668 = vunpack.c.l.b16 %v477
        %v669 = vunpack.c.h.b16 %v477
        %v670 = vunpack.c.l.b16 %v478
        %v671 = vunpack.c.h.b16 %v478
        %v672 = vunpack.c.l.b16 %v479
        %v673 = vunpack.c.h.b16 %v479
        %v674 = vunpack.c.l.b16 %v480
        %v675 = vunpack.c.h.b16 %v480
        %v676 = vunpack.c.l.b16 %v481
        %v677 = vunpack.c.h.b16 %v481
        %v678 = vunpack.c.l.b16 %v482
        %v679 = vunpack.c.h.b16 %v482
        %v680 = vunpack.c.l.b16 %v483
        %v681 = vunpack.c.h.b16 %v483
        %v682 = vunpack.c.l.b16 %v484
        %v683 = vunpack.c.h.b16 %v484
        %v684 = vunpack.c.l.b16 %v485
        %v685 = vunpack.c.h.b16 %v485
        %v686 = vunpack.c.l.b16 %v486
        %v687 = vunpack.c.h.b16 %v486
        %v688 = vunpack.c.l.b16 %v487
        %v689 = vunpack.c.h.b16 %v487
        %v690 = vunpack.c.l.b16 %v488
        %v691 = vunpack.c.h.b16 %v488
        %v692 = vunpack.c.l.b16 %v489
        %v693 = vunpack.c.h.b16 %v489
        %v694 = vunpack.c.l.b16 %v490
        %v695 = vunpack.c.h.b16 %v490
        %v696 = vunpack.c.l.b16 %v491
        %v697 = vunpack.c.h.b16 %v491
        %v698 = vunpack.c.l.b16 %v492
        %v699 = vunpack.c.h.b16 %v492
        %v700 = vunpack.c.l.b16 %v493
        %v701 = vunpack.c.h.b16 %v493
        %v702 = vunpack.c.l.b16 %v494
        %v703 = vunpack.c.h.b16 %v494
        %v704 = vunpack.c.l.b16 %v495
        %v705 = vunpack.c.h.b16 %v495
        %v706 = vunpack.c.l.b16 %v496
        %v707 = vunpack.c.h.b16 %v496
        %v708 = vunpack.c.l.b16 %v497
        %v709 = vunpack.c.h.b16 %v497
        %v710 = vunpack.c.l.b16 %v498
        %v711 = vunpack.c.h.b16 %v498
        %v712 = vunpack.c.l.b16 %v499
        %v713 = vunpack.c.h.b16 %v499
        %v714 = vunpack.c.l.b16 %v500
        %v715 = vunpack.c.h.b16 %v500
        %v716 = vunpack.c.l.b16 %v501
        %v717 = vunpack.c.h.b16 %v501
        %v718 = vunpack.c.l.b16 %v502
        %v719 = vunpack.c.h.b16 %v502
        %v720 = vunpack.c.l.b16 %v503
        %v721 = vunpack.c.h.b16 %v503
        %v722 = vunpack.c.l.b16 %v504
        %v723 = vunpack.c.h.b16 %v504
        %v724 = vunpack.c.l.b16 %v505
        %v725 = vunpack.c.h.b16 %v505
        %v726 = vunpack.c.l.b16 %v506
        %v727 = vunpack.c.h.b16 %v506
        %v728 = vunpack.c.l.b16 %v507
        %v729 = vunpack.c.h.b16 %v507
        %v730 = vunpack.c.l.b16 %v508
        %v731 = vunpack.c.h.b16 %v508
        %v732 = vunpack.c.l.b16 %v509
        %v733 = vunpack.c.h.b16 %v509
        %v734 = vpack.c.b16 %v608, %v606
        %v735 = vpack.c.b16 %v609, %v607
        %v736 = vpack.c.b16 %v612, %v610
        %v737 = vpack.c.b16 %v613, %v611
        %v738 = vpack.c.b16 %v616, %v614
        %v739 = vpack.c.b16 %v617, %v615
        %v740 = vpack.c.b16 %v620, %v618
        %v741 = vpack.c.b16 %v621, %v619
        %v742 = vpack.c.b16 %v624, %v622
        %v743 = vpack.c.b16 %v625, %v623
        %v744 = vpack.c.b16 %v628, %v626
        %v745 = vpack.c.b16 %v629, %v627
        %v746 = vpack.c.b16 %v632, %v630
        %v747 = vpack.c.b16 %v633, %v631
        %v748 = vpack.c.b16 %v636, %v634
        %v749 = vpack.c.b16 %v637, %v635
        %v750 = vpack.c.b16 %v640, %v638
        %v751 = vpack.c.b16 %v641, %v639
        %v752 = vpack.c.b16 %v644, %v642
        %v753 = vpack.c.b16 %v645, %v643
        %v754 = vpack.c.b16 %v648, %v646
        %v755 = vpack.c.b16 %v649, %v647
        %v756 = vpack.c.b16 %v652, %v650
        %v757 = vpack.c.b16 %v653, %v651
        %v758 = vpack.c.b16 %v656, %v654
        %v759 = vpack.c.b16 %v657, %v655
        %v760 = vpack.c.b16 %v660, %v658
        %v761 = vpack.c.b16 %v661, %v659
        %v762 = vpack.c.b16 %v664, %v662
        %v763 = vpack.c.b16 %v665, %v663
        %v764 = vpack.c.b16 %v668, %v666
        %v765 = vpack.c.b16 %v669, %v667
        %v766 = vpack.c.b16 %v672, %v670
        %v767 = vpack.c.b16 %v673, %v671
        %v768 = vpack.c.b16 %v676, %v674
        %v769 = vpack.c.b16 %v677, %v675
        %v770 = vpack.c.b16 %v680, %v678
        %v771 = vpack.c.b16 %v681, %v679
        %v772 = vpack.c.b16 %v684, %v682
        %v773 = vpack.c.b16 %v685, %v683
        %v774 = vpack.c.b16 %v688, %v686
        %v775 = vpack.c.b16 %v689, %v687
        %v776 = vpack.c.b16 %v692, %v690
        %v777 = vpack.c.b16 %v693, %v691
        %v778 = vpack.c.b16 %v696, %v694
        %v779 = vpack.c.b16 %v697, %v695
        %v780 = vpack.c.b16 %v700, %v698
        %v781 = vpack.c.b16 %v701, %v699
        %v782 = vpack.c.b16 %v704, %v702
        %v783 = vpack.c.b16 %v705, %v703
        %v784 = vpack.c.b16 %v708, %v706
        %v785 = vpack.c.b16 %v709, %v707
        %v786 = vpack.c.b16 %v712, %v710
        %v787 = vpack.c.b16 %v713, %v711
        %v788 = vpack.c.b16 %v716, %v714
        %v789 = vpack.c.b16 %v717, %v715
        %v790 = vpack.c.b16 %v720, %v718
        %v791 = vpack.c.b16 %v721, %v719
        %v792 = vpack.c.b16 %v724, %v722
        %v793 = vpack.c.b16 %v725, %v723
        %v794 = vpack.c.b16 %v728, %v726
        %v795 = vpack.c.b16 %v729, %v727
        %v796 = vpack.c.b16 %v732, %v730
        %v797 = vpack.c.b16 %v733, %v731
        %v894 = vunpack.c.l.b16 %v510
        %v895 = vunpack.c.l.b16 %v511
        %v896 = vunpack.c.l.b16 %v512
        %v897 = vunpack.c.l.b16 %v513
        %v898 = vunpack.c.l.b16 %v514
        %v899 = vunpack.c.l.b16 %v515
        %v900 = vunpack.c.l.b16 %v516
        %v901 = vunpack.c.l.b16 %v517
        %v902 = vunpack.c.l.b16 %v518
        %v903 = vunpack.c.l.b16 %v519
        %v904 = vunpack.c.l.b16 %v520
        %v905 = vunpack.c.l.b16 %v521
        %v906 = vunpack.c.l.b16 %v522
        %v907 = vunpack.c.l.b16 %v523
        %v908 = vunpack.c.l.b16 %v524
        %v909 = vunpack.c.l.b16 %v525
        %v910 = vunpack.c.l.b16 %v526
        %v911 = vunpack.c.l.b16 %v527
        %v912 = vunpack.c.l.b16 %v528
        %v913 = vunpack.c.l.b16 %v529
        %v914 = vunpack.c.l.b16 %v530
        %v915 = vunpack.c.l.b16 %v531
        %v916 = vunpack.c.l.b16 %v532
        %v917 = vunpack.c.l.b16 %v533
        %v918 = vunpack.c.l.b16 %v534
        %v919 = vunpack.c.l.b16 %v535
        %v920 = vunpack.c.l.b16 %v536
        %v921 = vunpack.c.l.b16 %v537
        %v922 = vunpack.c.l.b16 %v538
        %v923 = vunpack.c.l.b16 %v539
        %v924 = vunpack.c.l.b16 %v540
        %v925 = vunpack.c.l.b16 %v541
        %v926 = vpack.c.b16 %v895, %v894
        %v927 = vpack.c.b16 %v897, %v896
        %v928 = vpack.c.b16 %v899, %v898
        %v929 = vpack.c.b16 %v901, %v900
        %v930 = vpack.c.b16 %v903, %v902
        %v931 = vpack.c.b16 %v905, %v904
        %v932 = vpack.c.b16 %v907, %v906
        %v933 = vpack.c.b16 %v909, %v908
        %v934 = vpack.c.b16 %v911, %v910
        %v935 = vpack.c.b16 %v913, %v912
        %v936 = vpack.c.b16 %v915, %v914
        %v937 = vpack.c.b16 %v917, %v916
        %v938 = vpack.c.b16 %v919, %v918
        %v939 = vpack.c.b16 %v921, %v920
        %v940 = vpack.c.b16 %v923, %v922
        %v941 = vpack.c.b16 %v925, %v924
        %958 = vmatprep.subr.bf16.mxu0 0
        %959 = vmatpush1.bf16.msra.mxu0 %v926
        %960 = vmatprep.subr.bf16.mxu0 0
        %961 = vmatpush1.bf16.msra.mxu0 %v927
        %962 = vmatprep.subr.bf16.mxu0 0
        %963 = vmatpush1.bf16.msra.mxu0 %v928
        %964 = vmatprep.subr.bf16.mxu0 0
        %965 = vmatpush1.bf16.msra.mxu0 %v929
        %966 = vmatprep.subr.bf16.mxu0 0
        %967 = vmatpush1.bf16.msra.mxu0 %v930
        %968 = vmatprep.subr.bf16.mxu0 0
        %969 = vmatpush1.bf16.msra.mxu0 %v931
        %970 = vmatprep.subr.bf16.mxu0 0
        %971 = vmatpush1.bf16.msra.mxu0 %v932
        %972 = vmatprep.subr.bf16.mxu0 0
        %973 = vmatpush1.bf16.msra.mxu0 %v933
        %974 = vmatprep.subr.bf16.mxu0 0
        %975 = vmatpush1.bf16.msra.mxu0 %v934
        %976 = vmatprep.subr.bf16.mxu0 0
        %977 = vmatpush1.bf16.msra.mxu0 %v935
        %978 = vmatprep.subr.bf16.mxu0 0
        %979 = vmatpush1.bf16.msra.mxu0 %v936
        %980 = vmatprep.subr.bf16.mxu0 0
        %981 = vmatpush1.bf16.msra.mxu0 %v937
        %982 = vmatprep.subr.bf16.mxu0 0
        %983 = vmatpush1.bf16.msra.mxu0 %v938
        %984 = vmatprep.subr.bf16.mxu0 0
        %985 = vmatpush1.bf16.msra.mxu0 %v939
        %986 = vmatprep.subr.bf16.mxu0 0
        %987 = vmatpush1.bf16.msra.mxu0 %v940
        %988 = vmatprep.subr.bf16.mxu0 0
        %989 = vmatpush1.bf16.msra.mxu0 %v941
        %990 = vmatprep.mubr.bf16.mxu0 %v735
        %991 = vmatmul.mubr.bf16.gmra.mrb[0].mxu0 %v734
        %v992 = vpop.f32.mrb[0].mxu0
        %v993 = vadd.f32 0.0, %v992
        %v994 = vpop.f32.mrb[0].mxu0
        %v995 = vpop.f32.mrb[0].mxu0
        %v996 = vadd.f32 0.0, %v995
        %v997 = vpop.f32.mrb[0].mxu0
        %998 = vmatprep.mubr.bf16.mxu0 %v737
        %999 = vmatmul.mubr.bf16.gmra.mrb[0].mxu0 %v736
        %v1000 = vpop.f32.mrb[0].mxu0
        %v1001 = vadd.f32 0.0, %v1000
        %v1002 = vpop.f32.mrb[0].mxu0
        %v1003 = vpop.f32.mrb[0].mxu0
        %v1004 = vadd.f32 0.0, %v1003
        %v1005 = vpop.f32.mrb[0].mxu0
        %1006 = vmatprep.mubr.bf16.mxu0 %v739
        %1007 = vmatmul.mubr.bf16.gmra.mrb[0].mxu0 %v738
        %v1008 = vpop.f32.mrb[0].mxu0
        %v1009 = vadd.f32 0.0, %v1008
        %v1010 = vpop.f32.mrb[0].mxu0
        %v1011 = vpop.f32.mrb[0].mxu0
        %v1012 = vadd.f32 0.0, %v1011
        %v1013 = vpop.f32.mrb[0].mxu0
        %1014 = vmatprep.mubr.bf16.mxu0 %v741
        %1015 = vmatmul.mubr.bf16.gmra.mrb[0].mxu0 %v740
        %v1016 = vpop.f32.mrb[0].mxu0
        %v1017 = vadd.f32 0.0, %v1016
        %v1018 = vpop.f32.mrb[0].mxu0
        %v1019 = vpop.f32.mrb[0].mxu0
        %v1020 = vadd.f32 0.0, %v1019
        %v1021 = vpop.f32.mrb[0].mxu0
        %1022 = vmatprep.mubr.bf16.mxu0 %v743
        %1023 = vmatmul.mubr.bf16.gmra.mrb[0].mxu0 %v742
        %v1024 = vpop.f32.mrb[0].mxu0
        %v1025 = vadd.f32 0.0, %v1024
        %v1026 = vpop.f32.mrb[0].mxu0
        %v1027 = vpop.f32.mrb[0].mxu0
        %v1028 = vadd.f32 0.0, %v1027
        %v1029 = vpop.f32.mrb[0].mxu0
        %1030 = vmatprep.mubr.bf16.mxu0 %v745
        %1031 = vmatmul.mubr.bf16.gmra.mrb[0].mxu0 %v744
        %v1032 = vpop.f32.mrb[0].mxu0
        %v1033 = vadd.f32 0.0, %v1032
        %v1034 = vpop.f32.mrb[0].mxu0
        %v1035 = vpop.f32.mrb[0].mxu0
        %v1036 = vadd.f32 0.0, %v1035
        %v1037 = vpop.f32.mrb[0].mxu0
        %1038 = vmatprep.mubr.bf16.mxu0 %v747
        %1039 = vmatmul.mubr.bf16.gmra.mrb[0].mxu0 %v746
        %v1040 = vpop.f32.mrb[0].mxu0
        %v1041 = vadd.f32 0.0, %v1040
        %v1042 = vpop.f32.mrb[0].mxu0
        %v1043 = vpop.f32.mrb[0].mxu0
        %v1044 = vadd.f32 0.0, %v1043
        %v1045 = vpop.f32.mrb[0].mxu0
        %1046 = vmatprep.mubr.bf16.mxu0 %v749
        %1047 = vmatmul.mubr.bf16.gmra.mrb[0].mxu0 %v748
        %v1048 = vpop.f32.mrb[0].mxu0
        %v1049 = vadd.f32 0.0, %v1048
        %v1050 = vpop.f32.mrb[0].mxu0
        %v1051 = vpop.f32.mrb[0].mxu0
        %v1052 = vadd.f32 0.0, %v1051
        %v1053 = vpop.f32.mrb[0].mxu0
        %1054 = vmatprep.mubr.bf16.mxu0 %v751
        %1055 = vmatmul.mubr.bf16.gmra.mrb[0].mxu0 %v750
        %v1056 = vpop.f32.mrb[0].mxu0
        %v1057 = vadd.f32 0.0, %v1056
        %v1058 = vpop.f32.mrb[0].mxu0
        %v1059 = vpop.f32.mrb[0].mxu0
        %v1060 = vadd.f32 0.0, %v1059
        %v1061 = vpop.f32.mrb[0].mxu0
        %1062 = vmatprep.mubr.bf16.mxu0 %v753
        %1063 = vmatmul.mubr.bf16.gmra.mrb[0].mxu0 %v752
        %v1064 = vpop.f32.mrb[0].mxu0
        %v1065 = vadd.f32 0.0, %v1064
        %v1066 = vpop.f32.mrb[0].mxu0
        %v1067 = vpop.f32.mrb[0].mxu0
        %v1068 = vadd.f32 0.0, %v1067
        %v1069 = vpop.f32.mrb[0].mxu0
        %1070 = vmatprep.mubr.bf16.mxu0 %v755
        %1071 = vmatmul.mubr.bf16.gmra.mrb[0].mxu0 %v754
        %v1072 = vpop.f32.mrb[0].mxu0
        %v1073 = vadd.f32 0.0, %v1072
        %v1074 = vpop.f32.mrb[0].mxu0
        %v1075 = vpop.f32.mrb[0].mxu0
        %v1076 = vadd.f32 0.0, %v1075
        %v1077 = vpop.f32.mrb[0].mxu0
        %1078 = vmatprep.mubr.bf16.mxu0 %v757
        %1079 = vmatmul.mubr.bf16.gmra.mrb[0].mxu0 %v756
        %v1080 = vpop.f32.mrb[0].mxu0
        %v1081 = vadd.f32 0.0, %v1080
        %v1082 = vpop.f32.mrb[0].mxu0
        %v1083 = vpop.f32.mrb[0].mxu0
        %v1084 = vadd.f32 0.0, %v1083
        %v1085 = vpop.f32.mrb[0].mxu0
        %1086 = vmatprep.mubr.bf16.mxu0 %v759
        %1087 = vmatmul.mubr.bf16.gmra.mrb[0].mxu0 %v758
        %v1088 = vpop.f32.mrb[0].mxu0
        %v1089 = vadd.f32 0.0, %v1088
        %v1090 = vpop.f32.mrb[0].mxu0
        %v1091 = vpop.f32.mrb[0].mxu0
        %v1092 = vadd.f32 0.0, %v1091
        %v1093 = vpop.f32.mrb[0].mxu0
        %1094 = vmatprep.mubr.bf16.mxu0 %v761
        %1095 = vmatmul.mubr.bf16.gmra.mrb[0].mxu0 %v760
        %v1096 = vpop.f32.mrb[0].mxu0
        %v1097 = vadd.f32 0.0, %v1096
        %v1098 = vpop.f32.mrb[0].mxu0
        %v1099 = vpop.f32.mrb[0].mxu0
        %v1100 = vadd.f32 0.0, %v1099
        %v1101 = vpop.f32.mrb[0].mxu0
        %1102 = vmatprep.mubr.bf16.mxu0 %v763
        %1103 = vmatmul.mubr.bf16.gmra.mrb[0].mxu0 %v762
        %v1104 = vpop.f32.mrb[0].mxu0
        %v1105 = vadd.f32 0.0, %v1104
        %v1106 = vpop.f32.mrb[0].mxu0
        %v1107 = vpop.f32.mrb[0].mxu0
        %v1108 = vadd.f32 0.0, %v1107
        %v1109 = vpop.f32.mrb[0].mxu0
        %1110 = vmatprep.mubr.bf16.mxu0 %v765
        %1111 = vmatmul.mubr.bf16.gmra.mrb[0].mxu0 %v764
        %v1112 = vpop.f32.mrb[0].mxu0
        %v1113 = vadd.f32 0.0, %v1112
        %v1114 = vpop.f32.mrb[0].mxu0
        %v1115 = vpop.f32.mrb[0].mxu0
        %v1116 = vadd.f32 0.0, %v1115
        %v1117 = vpop.f32.mrb[0].mxu0
        %1118 = vmatprep.mubr.bf16.mxu0 %v767
        %1119 = vmatmul.mubr.bf16.gmra.mrb[0].mxu0 %v766
        %v1120 = vpop.f32.mrb[0].mxu0
        %v1121 = vadd.f32 0.0, %v1120
        %v1122 = vpop.f32.mrb[0].mxu0
        %v1123 = vpop.f32.mrb[0].mxu0
        %v1124 = vadd.f32 0.0, %v1123
        %v1125 = vpop.f32.mrb[0].mxu0
        %1126 = vmatprep.mubr.bf16.mxu0 %v769
        %1127 = vmatmul.mubr.bf16.gmra.mrb[0].mxu0 %v768
        %v1128 = vpop.f32.mrb[0].mxu0
        %v1129 = vadd.f32 0.0, %v1128
        %v1130 = vpop.f32.mrb[0].mxu0
        %v1131 = vpop.f32.mrb[0].mxu0
        %v1132 = vadd.f32 0.0, %v1131
        %v1133 = vpop.f32.mrb[0].mxu0
        %1134 = vmatprep.mubr.bf16.mxu0 %v771
        %1135 = vmatmul.mubr.bf16.gmra.mrb[0].mxu0 %v770
        %v1136 = vpop.f32.mrb[0].mxu0
        %v1137 = vadd.f32 0.0, %v1136
        %v1138 = vpop.f32.mrb[0].mxu0
        %v1139 = vpop.f32.mrb[0].mxu0
        %v1140 = vadd.f32 0.0, %v1139
        %v1141 = vpop.f32.mrb[0].mxu0
        %1142 = vmatprep.mubr.bf16.mxu0 %v773
        %1143 = vmatmul.mubr.bf16.gmra.mrb[0].mxu0 %v772
        %v1144 = vpop.f32.mrb[0].mxu0
        %v1145 = vadd.f32 0.0, %v1144
        %v1146 = vpop.f32.mrb[0].mxu0
        %v1147 = vpop.f32.mrb[0].mxu0
        %v1148 = vadd.f32 0.0, %v1147
        %v1149 = vpop.f32.mrb[0].mxu0
        %1150 = vmatprep.mubr.bf16.mxu0 %v775
        %1151 = vmatmul.mubr.bf16.gmra.mrb[0].mxu0 %v774
        %v1152 = vpop.f32.mrb[0].mxu0
        %v1153 = vadd.f32 0.0, %v1152
        %v1154 = vpop.f32.mrb[0].mxu0
        %v1155 = vpop.f32.mrb[0].mxu0
        %v1156 = vadd.f32 0.0, %v1155
        %v1157 = vpop.f32.mrb[0].mxu0
        %1158 = vmatprep.mubr.bf16.mxu0 %v777
        %1159 = vmatmul.mubr.bf16.gmra.mrb[0].mxu0 %v776
        %v1160 = vpop.f32.mrb[0].mxu0
        %v1161 = vadd.f32 0.0, %v1160
        %v1162 = vpop.f32.mrb[0].mxu0
        %v1163 = vpop.f32.mrb[0].mxu0
        %v1164 = vadd.f32 0.0, %v1163
        %v1165 = vpop.f32.mrb[0].mxu0
        %1166 = vmatprep.mubr.bf16.mxu0 %v779
        %1167 = vmatmul.mubr.bf16.gmra.mrb[0].mxu0 %v778
        %v1168 = vpop.f32.mrb[0].mxu0
        %v1169 = vadd.f32 0.0, %v1168
        %v1170 = vpop.f32.mrb[0].mxu0
        %v1171 = vpop.f32.mrb[0].mxu0
        %v1172 = vadd.f32 0.0, %v1171
        %v1173 = vpop.f32.mrb[0].mxu0
        %1174 = vmatprep.mubr.bf16.mxu0 %v781
        %1175 = vmatmul.mubr.bf16.gmra.mrb[0].mxu0 %v780
        %v1176 = vpop.f32.mrb[0].mxu0
        %v1177 = vadd.f32 0.0, %v1176
        %v1178 = vpop.f32.mrb[0].mxu0
        %v1179 = vpop.f32.mrb[0].mxu0
        %v1180 = vadd.f32 0.0, %v1179
        %v1181 = vpop.f32.mrb[0].mxu0
        %1182 = vmatprep.mubr.bf16.mxu0 %v783
        %1183 = vmatmul.mubr.bf16.gmra.mrb[0].mxu0 %v782
        %v1184 = vpop.f32.mrb[0].mxu0
        %v1185 = vadd.f32 0.0, %v1184
        %v1186 = vpop.f32.mrb[0].mxu0
        %v1187 = vpop.f32.mrb[0].mxu0
        %v1188 = vadd.f32 0.0, %v1187
        %v1189 = vpop.f32.mrb[0].mxu0
        %1190 = vmatprep.mubr.bf16.mxu0 %v785
        %1191 = vmatmul.mubr.bf16.gmra.mrb[0].mxu0 %v784
        %v1192 = vpop.f32.mrb[0].mxu0
        %v1193 = vadd.f32 0.0, %v1192
        %v1194 = vpop.f32.mrb[0].mxu0
        %v1195 = vpop.f32.mrb[0].mxu0
        %v1196 = vadd.f32 0.0, %v1195
        %v1197 = vpop.f32.mrb[0].mxu0
        %1198 = vmatprep.mubr.bf16.mxu0 %v787
        %1199 = vmatmul.mubr.bf16.gmra.mrb[0].mxu0 %v786
        %v1200 = vpop.f32.mrb[0].mxu0
        %v1201 = vadd.f32 0.0, %v1200
        %v1202 = vpop.f32.mrb[0].mxu0
        %v1203 = vpop.f32.mrb[0].mxu0
        %v1204 = vadd.f32 0.0, %v1203
        %v1205 = vpop.f32.mrb[0].mxu0
        %1206 = vmatprep.mubr.bf16.mxu0 %v789
        %1207 = vmatmul.mubr.bf16.gmra.mrb[0].mxu0 %v788
        %v1208 = vpop.f32.mrb[0].mxu0
        %v1209 = vadd.f32 0.0, %v1208
        %v1210 = vpop.f32.mrb[0].mxu0
        %v1211 = vpop.f32.mrb[0].mxu0
        %v1212 = vadd.f32 0.0, %v1211
        %v1213 = vpop.f32.mrb[0].mxu0
        %1214 = vmatprep.mubr.bf16.mxu0 %v791
        %1215 = vmatmul.mubr.bf16.gmra.mrb[0].mxu0 %v790
        %v1216 = vpop.f32.mrb[0].mxu0
        %v1217 = vadd.f32 0.0, %v1216
        %v1218 = vpop.f32.mrb[0].mxu0
        %v1219 = vpop.f32.mrb[0].mxu0
        %v1220 = vadd.f32 0.0, %v1219
        %v1221 = vpop.f32.mrb[0].mxu0
        %1222 = vmatprep.mubr.bf16.mxu0 %v793
        %1223 = vmatmul.mubr.bf16.gmra.mrb[0].mxu0 %v792
        %v1224 = vpop.f32.mrb[0].mxu0
        %v1225 = vadd.f32 0.0, %v1224
        %v1226 = vpop.f32.mrb[0].mxu0
        %v1227 = vpop.f32.mrb[0].mxu0
        %v1228 = vadd.f32 0.0, %v1227
        %v1229 = vpop.f32.mrb[0].mxu0
        %1230 = vmatprep.mubr.bf16.mxu0 %v795
        %1231 = vmatmul.mubr.bf16.gmra.mrb[0].mxu0 %v794
        %v1232 = vpop.f32.mrb[0].mxu0
        %v1233 = vadd.f32 0.0, %v1232
        %v1234 = vpop.f32.mrb[0].mxu0
        %v1235 = vpop.f32.mrb[0].mxu0
        %v1236 = vadd.f32 0.0, %v1235
        %v1237 = vpop.f32.mrb[0].mxu0
        %1238 = vmatprep.mubr.bf16.mxu0 %v797
        %1239 = vmatmul.mubr.bf16.gmra.mrb[0].mxu0 %v796
        %v1240 = vpop.f32.mrb[0].mxu0
        %v1241 = vadd.f32 0.0, %v1240
        %v1242 = vpop.f32.mrb[0].mxu0
        %v1243 = vpop.f32.mrb[0].mxu0
        %v1244 = vadd.f32 0.0, %v1243
        %v1245 = vpop.f32.mrb[0].mxu0
        %1246 = vdwg.mxu0
        %v1247 = vadd.f32 %v382, %v993
        %v1248 = vadd.f32 %v383, %v996
        %v1249 = vadd.f32 %v384, %v1001
        %v1250 = vadd.f32 %v385, %v1004
        %v1251 = vadd.f32 %v386, %v1009
        %v1252 = vadd.f32 %v387, %v1012
        %v1253 = vadd.f32 %v388, %v1017
        %v1254 = vadd.f32 %v389, %v1020
        %v1255 = vadd.f32 %v390, %v1025
        %v1256 = vadd.f32 %v391, %v1028
        %v1257 = vadd.f32 %v392, %v1033
        %v1258 = vadd.f32 %v393, %v1036
        %v1259 = vadd.f32 %v394, %v1041
        %v1260 = vadd.f32 %v395, %v1044
        %v1261 = vadd.f32 %v396, %v1049
        %v1262 = vadd.f32 %v397, %v1052
        %v1263 = vadd.f32 %v398, %v1057
        %v1264 = vadd.f32 %v399, %v1060
        %v1265 = vadd.f32 %v400, %v1065
        %v1266 = vadd.f32 %v401, %v1068
        %v1267 = vadd.f32 %v402, %v1073
        %v1268 = vadd.f32 %v403, %v1076
        %v1269 = vadd.f32 %v404, %v1081
        %v1270 = vadd.f32 %v405, %v1084
        %v1271 = vadd.f32 %v406, %v1089
        %v1272 = vadd.f32 %v407, %v1092
        %v1273 = vadd.f32 %v408, %v1097
        %v1274 = vadd.f32 %v409, %v1100
        %v1275 = vadd.f32 %v410, %v1105
        %v1276 = vadd.f32 %v411, %v1108
        %v1277 = vadd.f32 %v412, %v1113
        %v1278 = vadd.f32 %v413, %v1116
        %v1279 = vadd.f32 %v414, %v1121
        %v1280 = vadd.f32 %v415, %v1124
        %v1281 = vadd.f32 %v416, %v1129
        %v1282 = vadd.f32 %v417, %v1132
        %v1283 = vadd.f32 %v418, %v1137
        %v1284 = vadd.f32 %v419, %v1140
        %v1285 = vadd.f32 %v420, %v1145
        %v1286 = vadd.f32 %v421, %v1148
        %v1287 = vadd.f32 %v422, %v1153
        %v1288 = vadd.f32 %v423, %v1156
        %v1289 = vadd.f32 %v424, %v1161
        %v1290 = vadd.f32 %v425, %v1164
        %v1291 = vadd.f32 %v426, %v1169
        %v1292 = vadd.f32 %v427, %v1172
        %v1293 = vadd.f32 %v428, %v1177
        %v1294 = vadd.f32 %v429, %v1180
        %v1295 = vadd.f32 %v430, %v1185
        %v1296 = vadd.f32 %v431, %v1188
        %v1297 = vadd.f32 %v432, %v1193
        %v1298 = vadd.f32 %v433, %v1196
        %v1299 = vadd.f32 %v434, %v1201
        %v1300 = vadd.f32 %v435, %v1204
        %v1301 = vadd.f32 %v436, %v1209
        %v1302 = vadd.f32 %v437, %v1212
        %v1303 = vadd.f32 %v438, %v1217
        %v1304 = vadd.f32 %v439, %v1220
        %v1305 = vadd.f32 %v440, %v1225
        %v1306 = vadd.f32 %v441, %v1228
        %v1307 = vadd.f32 %v442, %v1233
        %v1308 = vadd.f32 %v443, %v1236
        %v1309 = vadd.f32 %v444, %v1241
        %v1310 = vadd.f32 %v445, %v1244
        %1311 = vst [vmem:[#allocation2] sm:$0xff] %v1247
        %1312 = vst [vmem:[#allocation2 + $0x8] sm:$0xff] %v1248
        %1313 = vst [vmem:[#allocation2 + $0x10] sm:$0xff] %v1249
        %1314 = vst [vmem:[#allocation2 + $0x18] sm:$0xff] %v1250
        %1315 = vst [vmem:[#allocation2 + $0x20] sm:$0xff] %v1251
        %1316 = vst [vmem:[#allocation2 + $0x28] sm:$0xff] %v1252
        %1317 = vst [vmem:[#allocation2 + $0x30] sm:$0xff] %v1253
        %1318 = vst [vmem:[#allocation2 + $0x38] sm:$0xff] %v1254
        %1319 = vst [vmem:[#allocation2 + $0x40] sm:$0xff] %v1255
        %1320 = vst [vmem:[#allocation2 + $0x48] sm:$0xff] %v1256
        %1321 = vst [vmem:[#allocation2 + $0x50] sm:$0xff] %v1257
        %1322 = vst [vmem:[#allocation2 + $0x58] sm:$0xff] %v1258
        %1323 = vst [vmem:[#allocation2 + $0x60] sm:$0xff] %v1259
        %1324 = vst [vmem:[#allocation2 + $0x68] sm:$0xff] %v1260
        %1325 = vst [vmem:[#allocation2 + $0x70] sm:$0xff] %v1261
        %1326 = vst [vmem:[#allocation2 + $0x78] sm:$0xff] %v1262
        %1327 = vst [vmem:[#allocation2 + $0x80] sm:$0xff] %v1263
        %1328 = vst [vmem:[#allocation2 + $0x88] sm:$0xff] %v1264
        %1329 = vst [vmem:[#allocation2 + $0x90] sm:$0xff] %v1265
        %1330 = vst [vmem:[#allocation2 + $0x98] sm:$0xff] %v1266
        %1331 = vst [vmem:[#allocation2 + $0xa0] sm:$0xff] %v1267
        %1332 = vst [vmem:[#allocation2 + $0xa8] sm:$0xff] %v1268
        %1333 = vst [vmem:[#allocation2 + $0xb0] sm:$0xff] %v1269
        %1334 = vst [vmem:[#allocation2 + $0xb8] sm:$0xff] %v1270
        %1335 = vst [vmem:[#allocation2 + $0xc0] sm:$0xff] %v1271
        %1336 = vst [vmem:[#allocation2 + $0xc8] sm:$0xff] %v1272
        %1337 = vst [vmem:[#allocation2 + $0xd0] sm:$0xff] %v1273
        %1338 = vst [vmem:[#allocation2 + $0xd8] sm:$0xff] %v1274
        %1339 = vst [vmem:[#allocation2 + $0xe0] sm:$0xff] %v1275
        %1340 = vst [vmem:[#allocation2 + $0xe8] sm:$0xff] %v1276
        %1341 = vst [vmem:[#allocation2 + $0xf0] sm:$0xff] %v1277
        %1342 = vst [vmem:[#allocation2 + $0xf8] sm:$0xff] %v1278
        %1343 = vst [vmem:[#allocation2 + $0x100] sm:$0xff] %v1279
        %1344 = vst [vmem:[#allocation2 + $0x108] sm:$0xff] %v1280
        %1345 = vst [vmem:[#allocation2 + $0x110] sm:$0xff] %v1281
        %1346 = vst [vmem:[#allocation2 + $0x118] sm:$0xff] %v1282
        %1347 = vst [vmem:[#allocation2 + $0x120] sm:$0xff] %v1283
        %1348 = vst [vmem:[#allocation2 + $0x128] sm:$0xff] %v1284
        %1349 = vst [vmem:[#allocation2 + $0x130] sm:$0xff] %v1285
        %1350 = vst [vmem:[#allocation2 + $0x138] sm:$0xff] %v1286
        %1351 = vst [vmem:[#allocation2 + $0x140] sm:$0xff] %v1287
        %1352 = vst [vmem:[#allocation2 + $0x148] sm:$0xff] %v1288
        %1353 = vst [vmem:[#allocation2 + $0x150] sm:$0xff] %v1289
        %1354 = vst [vmem:[#allocation2 + $0x158] sm:$0xff] %v1290
        %1355 = vst [vmem:[#allocation2 + $0x160] sm:$0xff] %v1291
        %1356 = vst [vmem:[#allocation2 + $0x168] sm:$0xff] %v1292
        %1357 = vst [vmem:[#allocation2 + $0x170] sm:$0xff] %v1293
        %1358 = vst [vmem:[#allocation2 + $0x178] sm:$0xff] %v1294
        %1359 = vst [vmem:[#allocation2 + $0x180] sm:$0xff] %v1295
        %1360 = vst [vmem:[#allocation2 + $0x188] sm:$0xff] %v1296
        %1361 = vst [vmem:[#allocation2 + $0x190] sm:$0xff] %v1297
        %1362 = vst [vmem:[#allocation2 + $0x198] sm:$0xff] %v1298
        %1363 = vst [vmem:[#allocation2 + $0x1a0] sm:$0xff] %v1299
        %1364 = vst [vmem:[#allocation2 + $0x1a8] sm:$0xff] %v1300
        %1365 = vst [vmem:[#allocation2 + $0x1b0] sm:$0xff] %v1301
        %1366 = vst [vmem:[#allocation2 + $0x1b8] sm:$0xff] %v1302
        %1367 = vst [vmem:[#allocation2 + $0x1c0] sm:$0xff] %v1303
        %1368 = vst [vmem:[#allocation2 + $0x1c8] sm:$0xff] %v1304
        %1369 = vst [vmem:[#allocation2 + $0x1d0] sm:$0xff] %v1305
        %1370 = vst [vmem:[#allocation2 + $0x1d8] sm:$0xff] %v1306
        %1371 = vst [vmem:[#allocation2 + $0x1e0] sm:$0xff] %v1307
        %1372 = vst [vmem:[#allocation2 + $0x1e8] sm:$0xff] %v1308
        %1373 = vst [vmem:[#allocation2 + $0x1f0] sm:$0xff] %v1309
        %1374 = vst [vmem:[#allocation2 + $0x1f8] sm:$0xff] %v1310
        // Predicated region
        $region49: #{tpu_custom_call.1} parent=35 // pred_check
          %p1375 = pneg %p314
        $region50: #{tpu_custom_call.1} parent=35 // pred_check_branch
          %1377 = sbr.rel (%p1375) target = $region52
        $region51: #{tpu_custom_call.1} parent=35 // pred_region
          %v1378 = vld [vmem:[#allocation2] sm:$0xff]
          %v1379 = vld [vmem:[#allocation2 + $0x8] sm:$0xff]
          %v1380 = vld [vmem:[#allocation2 + $0x10] sm:$0xff]
          %v1381 = vld [vmem:[#allocation2 + $0x18] sm:$0xff]
          %v1382 = vld [vmem:[#allocation2 + $0x20] sm:$0xff]
          %v1383 = vld [vmem:[#allocation2 + $0x28] sm:$0xff]
          %v1384 = vld [vmem:[#allocation2 + $0x30] sm:$0xff]
          %v1385 = vld [vmem:[#allocation2 + $0x38] sm:$0xff]
          %v1386 = vld [vmem:[#allocation2 + $0x40] sm:$0xff]
          %v1387 = vld [vmem:[#allocation2 + $0x48] sm:$0xff]
          %v1388 = vld [vmem:[#allocation2 + $0x50] sm:$0xff]
          %v1389 = vld [vmem:[#allocation2 + $0x58] sm:$0xff]
          %v1390 = vld [vmem:[#allocation2 + $0x60] sm:$0xff]
          %v1391 = vld [vmem:[#allocation2 + $0x68] sm:$0xff]
          %v1392 = vld [vmem:[#allocation2 + $0x70] sm:$0xff]
          %v1393 = vld [vmem:[#allocation2 + $0x78] sm:$0xff]
          %v1394 = vld [vmem:[#allocation2 + $0x80] sm:$0xff]
          %v1395 = vld [vmem:[#allocation2 + $0x88] sm:$0xff]
          %v1396 = vld [vmem:[#allocation2 + $0x90] sm:$0xff]
          %v1397 = vld [vmem:[#allocation2 + $0x98] sm:$0xff]
          %v1398 = vld [vmem:[#allocation2 + $0xa0] sm:$0xff]
          %v1399 = vld [vmem:[#allocation2 + $0xa8] sm:$0xff]
          %v1400 = vld [vmem:[#allocation2 + $0xb0] sm:$0xff]
          %v1401 = vld [vmem:[#allocation2 + $0xb8] sm:$0xff]
          %v1402 = vld [vmem:[#allocation2 + $0xc0] sm:$0xff]
          %v1403 = vld [vmem:[#allocation2 + $0xc8] sm:$0xff]
          %v1404 = vld [vmem:[#allocation2 + $0xd0] sm:$0xff]
          %v1405 = vld [vmem:[#allocation2 + $0xd8] sm:$0xff]
          %v1406 = vld [vmem:[#allocation2 + $0xe0] sm:$0xff]
          %v1407 = vld [vmem:[#allocation2 + $0xe8] sm:$0xff]
          %v1408 = vld [vmem:[#allocation2 + $0xf0] sm:$0xff]
          %v1409 = vld [vmem:[#allocation2 + $0xf8] sm:$0xff]
          %v1410 = vld [vmem:[#allocation2 + $0x100] sm:$0xff]
          %v1411 = vld [vmem:[#allocation2 + $0x108] sm:$0xff]
          %v1412 = vld [vmem:[#allocation2 + $0x110] sm:$0xff]
          %v1413 = vld [vmem:[#allocation2 + $0x118] sm:$0xff]
          %v1414 = vld [vmem:[#allocation2 + $0x120] sm:$0xff]
          %v1415 = vld [vmem:[#allocation2 + $0x128] sm:$0xff]
          %v1416 = vld [vmem:[#allocation2 + $0x130] sm:$0xff]
          %v1417 = vld [vmem:[#allocation2 + $0x138] sm:$0xff]
          %v1418 = vld [vmem:[#allocation2 + $0x140] sm:$0xff]
          %v1419 = vld [vmem:[#allocation2 + $0x148] sm:$0xff]
          %v1420 = vld [vmem:[#allocation2 + $0x150] sm:$0xff]
          %v1421 = vld [vmem:[#allocation2 + $0x158] sm:$0xff]
          %v1422 = vld [vmem:[#allocation2 + $0x160] sm:$0xff]
          %v1423 = vld [vmem:[#allocation2 + $0x168] sm:$0xff]
          %v1424 = vld [vmem:[#allocation2 + $0x170] sm:$0xff]
          %v1425 = vld [vmem:[#allocation2 + $0x178] sm:$0xff]
          %v1426 = vld [vmem:[#allocation2 + $0x180] sm:$0xff]
          %v1427 = vld [vmem:[#allocation2 + $0x188] sm:$0xff]
          %v1428 = vld [vmem:[#allocation2 + $0x190] sm:$0xff]
          %v1429 = vld [vmem:[#allocation2 + $0x198] sm:$0xff]
          %v1430 = vld [vmem:[#allocation2 + $0x1a0] sm:$0xff]
          %v1431 = vld [vmem:[#allocation2 + $0x1a8] sm:$0xff]
          %v1432 = vld [vmem:[#allocation2 + $0x1b0] sm:$0xff]
          %v1433 = vld [vmem:[#allocation2 + $0x1b8] sm:$0xff]
          %v1434 = vld [vmem:[#allocation2 + $0x1c0] sm:$0xff]
          %v1435 = vld [vmem:[#allocation2 + $0x1c8] sm:$0xff]
          %v1436 = vld [vmem:[#allocation2 + $0x1d0] sm:$0xff]
          %v1437 = vld [vmem:[#allocation2 + $0x1d8] sm:$0xff]
          %v1438 = vld [vmem:[#allocation2 + $0x1e0] sm:$0xff]
          %v1439 = vld [vmem:[#allocation2 + $0x1e8] sm:$0xff]
          %v1440 = vld [vmem:[#allocation2 + $0x1f0] sm:$0xff]
          %v1441 = vld [vmem:[#allocation2 + $0x1f8] sm:$0xff]
          %v1442 = vld [vmem:[%s308] sm:$0x1]
          %v1444 = vlaneseq
          %v1445 = vshrl.u32 %v1444, 7
          %v1446 = vsub.s32 0, %v1445
          %v1447 = vrot.slane %v1442, %v1446
          %v1449 = vmul.f32 %v1378, %v1447
          %v1450 = vmul.f32 %v1379, %v1447
          %v1451 = vmul.f32 %v1380, %v1447
          %v1452 = vmul.f32 %v1381, %v1447
          %v1453 = vmul.f32 %v1382, %v1447
          %v1454 = vmul.f32 %v1383, %v1447
          %v1455 = vmul.f32 %v1384, %v1447
          %v1456 = vmul.f32 %v1385, %v1447
          %v1457 = vmul.f32 %v1386, %v1447
          %v1458 = vmul.f32 %v1387, %v1447
          %v1459 = vmul.f32 %v1388, %v1447
          %v1460 = vmul.f32 %v1389, %v1447
          %v1461 = vmul.f32 %v1390, %v1447
          %v1462 = vmul.f32 %v1391, %v1447
          %v1463 = vmul.f32 %v1392, %v1447
          %v1464 = vmul.f32 %v1393, %v1447
          %v1465 = vmul.f32 %v1394, %v1447
          %v1466 = vmul.f32 %v1395, %v1447
          %v1467 = vmul.f32 %v1396, %v1447
          %v1468 = vmul.f32 %v1397, %v1447
          %v1469 = vmul.f32 %v1398, %v1447
          %v1470 = vmul.f32 %v1399, %v1447
          %v1471 = vmul.f32 %v1400, %v1447
          %v1472 = vmul.f32 %v1401, %v1447
          %v1473 = vmul.f32 %v1402, %v1447
          %v1474 = vmul.f32 %v1403, %v1447
          %v1475 = vmul.f32 %v1404, %v1447
          %v1476 = vmul.f32 %v1405, %v1447
          %v1477 = vmul.f32 %v1406, %v1447
          %v1478 = vmul.f32 %v1407, %v1447
          %v1479 = vmul.f32 %v1408, %v1447
          %v1480 = vmul.f32 %v1409, %v1447
          %v1481 = vmul.f32 %v1410, %v1447
          %v1482 = vmul.f32 %v1411, %v1447
          %v1483 = vmul.f32 %v1412, %v1447
          %v1484 = vmul.f32 %v1413, %v1447
          %v1485 = vmul.f32 %v1414, %v1447
          %v1486 = vmul.f32 %v1415, %v1447
          %v1487 = vmul.f32 %v1416, %v1447
          %v1488 = vmul.f32 %v1417, %v1447
          %v1489 = vmul.f32 %v1418, %v1447
          %v1490 = vmul.f32 %v1419, %v1447
          %v1491 = vmul.f32 %v1420, %v1447
          %v1492 = vmul.f32 %v1421, %v1447
          %v1493 = vmul.f32 %v1422, %v1447
          %v1494 = vmul.f32 %v1423, %v1447
          %v1495 = vmul.f32 %v1424, %v1447
          %v1496 = vmul.f32 %v1425, %v1447
          %v1497 = vmul.f32 %v1426, %v1447
          %v1498 = vmul.f32 %v1427, %v1447
          %v1499 = vmul.f32 %v1428, %v1447
          %v1500 = vmul.f32 %v1429, %v1447
          %v1501 = vmul.f32 %v1430, %v1447
          %v1502 = vmul.f32 %v1431, %v1447
          %v1503 = vmul.f32 %v1432, %v1447
          %v1504 = vmul.f32 %v1433, %v1447
          %v1505 = vmul.f32 %v1434, %v1447
          %v1506 = vmul.f32 %v1435, %v1447
          %v1507 = vmul.f32 %v1436, %v1447
          %v1508 = vmul.f32 %v1437, %v1447
          %v1509 = vmul.f32 %v1438, %v1447
          %v1510 = vmul.f32 %v1439, %v1447
          %v1511 = vmul.f32 %v1440, %v1447
          %v1512 = vmul.f32 %v1441, %v1447
          %v1513 = vld [vmem:[%s311] sm:$0x1]
          %v1515 = vlaneseq
          %v1516 = vshrl.u32 %v1515, 7
          %v1517 = vsub.s32 0, %v1516
          %v1518 = vrot.slane %v1513, %v1517
          %v1520 = vadd.f32 %v1449, %v1518
          %v1521 = vadd.f32 %v1450, %v1518
          %v1522 = vadd.f32 %v1451, %v1518
          %v1523 = vadd.f32 %v1452, %v1518
          %v1524 = vadd.f32 %v1453, %v1518
          %v1525 = vadd.f32 %v1454, %v1518
          %v1526 = vadd.f32 %v1455, %v1518
          %v1527 = vadd.f32 %v1456, %v1518
          %v1528 = vadd.f32 %v1457, %v1518
          %v1529 = vadd.f32 %v1458, %v1518
          %v1530 = vadd.f32 %v1459, %v1518
          %v1531 = vadd.f32 %v1460, %v1518
          %v1532 = vadd.f32 %v1461, %v1518
          %v1533 = vadd.f32 %v1462, %v1518
          %v1534 = vadd.f32 %v1463, %v1518
          %v1535 = vadd.f32 %v1464, %v1518
          %v1536 = vadd.f32 %v1465, %v1518
          %v1537 = vadd.f32 %v1466, %v1518
          %v1538 = vadd.f32 %v1467, %v1518
          %v1539 = vadd.f32 %v1468, %v1518
          %v1540 = vadd.f32 %v1469, %v1518
          %v1541 = vadd.f32 %v1470, %v1518
          %v1542 = vadd.f32 %v1471, %v1518
          %v1543 = vadd.f32 %v1472, %v1518
          %v1544 = vadd.f32 %v1473, %v1518
          %v1545 = vadd.f32 %v1474, %v1518
          %v1546 = vadd.f32 %v1475, %v1518
          %v1547 = vadd.f32 %v1476, %v1518
          %v1548 = vadd.f32 %v1477, %v1518
          %v1549 = vadd.f32 %v1478, %v1518
          %v1550 = vadd.f32 %v1479, %v1518
          %v1551 = vadd.f32 %v1480, %v1518
          %v1552 = vadd.f32 %v1481, %v1518
          %v1553 = vadd.f32 %v1482, %v1518
          %v1554 = vadd.f32 %v1483, %v1518
          %v1555 = vadd.f32 %v1484, %v1518
          %v1556 = vadd.f32 %v1485, %v1518
          %v1557 = vadd.f32 %v1486, %v1518
          %v1558 = vadd.f32 %v1487, %v1518
          %v1559 = vadd.f32 %v1488, %v1518
          %v1560 = vadd.f32 %v1489, %v1518
          %v1561 = vadd.f32 %v1490, %v1518
          %v1562 = vadd.f32 %v1491, %v1518
          %v1563 = vadd.f32 %v1492, %v1518
          %v1564 = vadd.f32 %v1493, %v1518
          %v1565 = vadd.f32 %v1494, %v1518
          %v1566 = vadd.f32 %v1495, %v1518
          %v1567 = vadd.f32 %v1496, %v1518
          %v1568 = vadd.f32 %v1497, %v1518
          %v1569 = vadd.f32 %v1498, %v1518
          %v1570 = vadd.f32 %v1499, %v1518
          %v1571 = vadd.f32 %v1500, %v1518
          %v1572 = vadd.f32 %v1501, %v1518
          %v1573 = vadd.f32 %v1502, %v1518
          %v1574 = vadd.f32 %v1503, %v1518
          %v1575 = vadd.f32 %v1504, %v1518
          %v1576 = vadd.f32 %v1505, %v1518
          %v1577 = vadd.f32 %v1506, %v1518
          %v1578 = vadd.f32 %v1507, %v1518
          %v1579 = vadd.f32 %v1508, %v1518
          %v1580 = vadd.f32 %v1509, %v1518
          %v1581 = vadd.f32 %v1510, %v1518
          %v1582 = vadd.f32 %v1511, %v1518
          %v1583 = vadd.f32 %v1512, %v1518
          %v1584 = vmax.f32 %v1520, 0.0
          %v1585 = vmax.f32 %v1521, 0.0
          %v1586 = vmax.f32 %v1522, 0.0
          %v1587 = vmax.f32 %v1523, 0.0
          %v1588 = vmax.f32 %v1524, 0.0
          %v1589 = vmax.f32 %v1525, 0.0
          %v1590 = vmax.f32 %v1526, 0.0
          %v1591 = vmax.f32 %v1527, 0.0
          %v1592 = vmax.f32 %v1528, 0.0
          %v1593 = vmax.f32 %v1529, 0.0
          %v1594 = vmax.f32 %v1530, 0.0
          %v1595 = vmax.f32 %v1531, 0.0
          %v1596 = vmax.f32 %v1532, 0.0
          %v1597 = vmax.f32 %v1533, 0.0
          %v1598 = vmax.f32 %v1534, 0.0
          %v1599 = vmax.f32 %v1535, 0.0
          %v1600 = vmax.f32 %v1536, 0.0
          %v1601 = vmax.f32 %v1537, 0.0
          %v1602 = vmax.f32 %v1538, 0.0
          %v1603 = vmax.f32 %v1539, 0.0
          %v1604 = vmax.f32 %v1540, 0.0
          %v1605 = vmax.f32 %v1541, 0.0
          %v1606 = vmax.f32 %v1542, 0.0
          %v1607 = vmax.f32 %v1543, 0.0
          %v1608 = vmax.f32 %v1544, 0.0
          %v1609 = vmax.f32 %v1545, 0.0
          %v1610 = vmax.f32 %v1546, 0.0
          %v1611 = vmax.f32 %v1547, 0.0
          %v1612 = vmax.f32 %v1548, 0.0
          %v1613 = vmax.f32 %v1549, 0.0
          %v1614 = vmax.f32 %v1550, 0.0
          %v1615 = vmax.f32 %v1551, 0.0
          %v1616 = vmax.f32 %v1552, 0.0
          %v1617 = vmax.f32 %v1553, 0.0
          %v1618 = vmax.f32 %v1554, 0.0
          %v1619 = vmax.f32 %v1555, 0.0
          %v1620 = vmax.f32 %v1556, 0.0
          %v1621 = vmax.f32 %v1557, 0.0
          %v1622 = vmax.f32 %v1558, 0.0
          %v1623 = vmax.f32 %v1559, 0.0
          %v1624 = vmax.f32 %v1560, 0.0
          %v1625 = vmax.f32 %v1561, 0.0
          %v1626 = vmax.f32 %v1562, 0.0
          %v1627 = vmax.f32 %v1563, 0.0
          %v1628 = vmax.f32 %v1564, 0.0
          %v1629 = vmax.f32 %v1565, 0.0
          %v1630 = vmax.f32 %v1566, 0.0
          %v1631 = vmax.f32 %v1567, 0.0
          %v1632 = vmax.f32 %v1568, 0.0
          %v1633 = vmax.f32 %v1569, 0.0
          %v1634 = vmax.f32 %v1570, 0.0
          %v1635 = vmax.f32 %v1571, 0.0
          %v1636 = vmax.f32 %v1572, 0.0
          %v1637 = vmax.f32 %v1573, 0.0
          %v1638 = vmax.f32 %v1574, 0.0
          %v1639 = vmax.f32 %v1575, 0.0
          %v1640 = vmax.f32 %v1576, 0.0
          %v1641 = vmax.f32 %v1577, 0.0
          %v1642 = vmax.f32 %v1578, 0.0
          %v1643 = vmax.f32 %v1579, 0.0
          %v1644 = vmax.f32 %v1580, 0.0
          %v1645 = vmax.f32 %v1581, 0.0
          %v1646 = vmax.f32 %v1582, 0.0
          %v1647 = vmax.f32 %v1583, 0.0
          %v1648 = vpack.c.bf16 %v1585, %v1584
          %v1649 = vpack.c.bf16 %v1587, %v1586
          %v1650 = vpack.c.bf16 %v1589, %v1588
          %v1651 = vpack.c.bf16 %v1591, %v1590
          %v1652 = vpack.c.bf16 %v1593, %v1592
          %v1653 = vpack.c.bf16 %v1595, %v1594
          %v1654 = vpack.c.bf16 %v1597, %v1596
          %v1655 = vpack.c.bf16 %v1599, %v1598
          %v1656 = vpack.c.bf16 %v1601, %v1600
          %v1657 = vpack.c.bf16 %v1603, %v1602
          %v1658 = vpack.c.bf16 %v1605, %v1604
          %v1659 = vpack.c.bf16 %v1607, %v1606
          %v1660 = vpack.c.bf16 %v1609, %v1608
          %v1661 = vpack.c.bf16 %v1611, %v1610
          %v1662 = vpack.c.bf16 %v1613, %v1612
          %v1663 = vpack.c.bf16 %v1615, %v1614
          %v1664 = vpack.c.bf16 %v1617, %v1616
          %v1665 = vpack.c.bf16 %v1619, %v1618
          %v1666 = vpack.c.bf16 %v1621, %v1620
          %v1667 = vpack.c.bf16 %v1623, %v1622
          %v1668 = vpack.c.bf16 %v1625, %v1624
          %v1669 = vpack.c.bf16 %v1627, %v1626
          %v1670 = vpack.c.bf16 %v1629, %v1628
          %v1671 = vpack.c.bf16 %v1631, %v1630
          %v1672 = vpack.c.bf16 %v1633, %v1632
          %v1673 = vpack.c.bf16 %v1635, %v1634
          %v1674 = vpack.c.bf16 %v1637, %v1636
          %v1675 = vpack.c.bf16 %v1639, %v1638
          %v1676 = vpack.c.bf16 %v1641, %v1640
          %v1677 = vpack.c.bf16 %v1643, %v1642
          %v1678 = vpack.c.bf16 %v1645, %v1644
          %v1679 = vpack.c.bf16 %v1647, %v1646
          %v1712 = vunpack.c.l.b16 %v1648
          %v1713 = vunpack.c.h.b16 %v1648
          %v1714 = vunpack.c.l.b16 %v1649
          %v1715 = vunpack.c.h.b16 %v1649
          %v1716 = vunpack.c.l.b16 %v1650
          %v1717 = vunpack.c.h.b16 %v1650
          %v1718 = vunpack.c.l.b16 %v1651
          %v1719 = vunpack.c.h.b16 %v1651
          %v1720 = vunpack.c.l.b16 %v1652
          %v1721 = vunpack.c.h.b16 %v1652
          %v1722 = vunpack.c.l.b16 %v1653
          %v1723 = vunpack.c.h.b16 %v1653
          %v1724 = vunpack.c.l.b16 %v1654
          %v1725 = vunpack.c.h.b16 %v1654
          %v1726 = vunpack.c.l.b16 %v1655
          %v1727 = vunpack.c.h.b16 %v1655
          %v1728 = vunpack.c.l.b16 %v1656
          %v1729 = vunpack.c.h.b16 %v1656
          %v1730 = vunpack.c.l.b16 %v1657
          %v1731 = vunpack.c.h.b16 %v1657
          %v1732 = vunpack.c.l.b16 %v1658
          %v1733 = vunpack.c.h.b16 %v1658
          %v1734 = vunpack.c.l.b16 %v1659
          %v1735 = vunpack.c.h.b16 %v1659
          %v1736 = vunpack.c.l.b16 %v1660
          %v1737 = vunpack.c.h.b16 %v1660
          %v1738 = vunpack.c.l.b16 %v1661
          %v1739 = vunpack.c.h.b16 %v1661
          %v1740 = vunpack.c.l.b16 %v1662
          %v1741 = vunpack.c.h.b16 %v1662
          %v1742 = vunpack.c.l.b16 %v1663
          %v1743 = vunpack.c.h.b16 %v1663
          %v1744 = vunpack.c.l.b16 %v1664
          %v1745 = vunpack.c.h.b16 %v1664
          %v1746 = vunpack.c.l.b16 %v1665
          %v1747 = vunpack.c.h.b16 %v1665
          %v1748 = vunpack.c.l.b16 %v1666
          %v1749 = vunpack.c.h.b16 %v1666
          %v1750 = vunpack.c.l.b16 %v1667
          %v1751 = vunpack.c.h.b16 %v1667
          %v1752 = vunpack.c.l.b16 %v1668
          %v1753 = vunpack.c.h.b16 %v1668
          %v1754 = vunpack.c.l.b16 %v1669
          %v1755 = vunpack.c.h.b16 %v1669
          %v1756 = vunpack.c.l.b16 %v1670
          %v1757 = vunpack.c.h.b16 %v1670
          %v1758 = vunpack.c.l.b16 %v1671
          %v1759 = vunpack.c.h.b16 %v1671
          %v1760 = vunpack.c.l.b16 %v1672
          %v1761 = vunpack.c.h.b16 %v1672
          %v1762 = vunpack.c.l.b16 %v1673
          %v1763 = vunpack.c.h.b16 %v1673
          %v1764 = vunpack.c.l.b16 %v1674
          %v1765 = vunpack.c.h.b16 %v1674
          %v1766 = vunpack.c.l.b16 %v1675
          %v1767 = vunpack.c.h.b16 %v1675
          %v1768 = vunpack.c.l.b16 %v1676
          %v1769 = vunpack.c.h.b16 %v1676
          %v1770 = vunpack.c.l.b16 %v1677
          %v1771 = vunpack.c.h.b16 %v1677
          %v1772 = vunpack.c.l.b16 %v1678
          %v1773 = vunpack.c.h.b16 %v1678
          %v1774 = vunpack.c.l.b16 %v1679
          %v1775 = vunpack.c.h.b16 %v1679
          %v1776 = vpack.c.b16 %v1712, %v1712
          %v1777 = vpack.c.b16 %v1713, %v1713
          %v1778 = vpack.c.b16 %v1714, %v1714
          %v1779 = vpack.c.b16 %v1715, %v1715
          %v1780 = vpack.c.b16 %v1716, %v1716
          %v1781 = vpack.c.b16 %v1717, %v1717
          %v1782 = vpack.c.b16 %v1718, %v1718
          %v1783 = vpack.c.b16 %v1719, %v1719
          %v1784 = vpack.c.b16 %v1720, %v1720
          %v1785 = vpack.c.b16 %v1721, %v1721
          %v1786 = vpack.c.b16 %v1722, %v1722
          %v1787 = vpack.c.b16 %v1723, %v1723
          %v1788 = vpack.c.b16 %v1724, %v1724
          %v1789 = vpack.c.b16 %v1725, %v1725
          %v1790 = vpack.c.b16 %v1726, %v1726
          %v1791 = vpack.c.b16 %v1727, %v1727
          %v1792 = vpack.c.b16 %v1728, %v1728
          %v1793 = vpack.c.b16 %v1729, %v1729
          %v1794 = vpack.c.b16 %v1730, %v1730
          %v1795 = vpack.c.b16 %v1731, %v1731
          %v1796 = vpack.c.b16 %v1732, %v1732
          %v1797 = vpack.c.b16 %v1733, %v1733
          %v1798 = vpack.c.b16 %v1734, %v1734
          %v1799 = vpack.c.b16 %v1735, %v1735
          %v1800 = vpack.c.b16 %v1736, %v1736
          %v1801 = vpack.c.b16 %v1737, %v1737
          %v1802 = vpack.c.b16 %v1738, %v1738
          %v1803 = vpack.c.b16 %v1739, %v1739
          %v1804 = vpack.c.b16 %v1740, %v1740
          %v1805 = vpack.c.b16 %v1741, %v1741
          %v1806 = vpack.c.b16 %v1742, %v1742
          %v1807 = vpack.c.b16 %v1743, %v1743
          %v1808 = vpack.c.b16 %v1744, %v1744
          %v1809 = vpack.c.b16 %v1745, %v1745
          %v1810 = vpack.c.b16 %v1746, %v1746
          %v1811 = vpack.c.b16 %v1747, %v1747
          %v1812 = vpack.c.b16 %v1748, %v1748
          %v1813 = vpack.c.b16 %v1749, %v1749
          %v1814 = vpack.c.b16 %v1750, %v1750
          %v1815 = vpack.c.b16 %v1751, %v1751
          %v1816 = vpack.c.b16 %v1752, %v1752
          %v1817 = vpack.c.b16 %v1753, %v1753
          %v1818 = vpack.c.b16 %v1754, %v1754
          %v1819 = vpack.c.b16 %v1755, %v1755
          %v1820 = vpack.c.b16 %v1756, %v1756
          %v1821 = vpack.c.b16 %v1757, %v1757
          %v1822 = vpack.c.b16 %v1758, %v1758
          %v1823 = vpack.c.b16 %v1759, %v1759
          %v1824 = vpack.c.b16 %v1760, %v1760
          %v1825 = vpack.c.b16 %v1761, %v1761
          %v1826 = vpack.c.b16 %v1762, %v1762
          %v1827 = vpack.c.b16 %v1763, %v1763
          %v1828 = vpack.c.b16 %v1764, %v1764
          %v1829 = vpack.c.b16 %v1765, %v1765
          %v1830 = vpack.c.b16 %v1766, %v1766
          %v1831 = vpack.c.b16 %v1767, %v1767
          %v1832 = vpack.c.b16 %v1768, %v1768
          %v1833 = vpack.c.b16 %v1769, %v1769
          %v1834 = vpack.c.b16 %v1770, %v1770
          %v1835 = vpack.c.b16 %v1771, %v1771
          %v1836 = vpack.c.b16 %v1772, %v1772
          %v1837 = vpack.c.b16 %v1773, %v1773
          %v1838 = vpack.c.b16 %v1774, %v1774
          %v1839 = vpack.c.b16 %v1775, %v1775
          %1904 = vst [vmem:[%s302] sm:$0xf] %v1776
          %1905 = vst [vmem:[%s302 + $0x4] sm:$0xf] %v1777
          %1906 = vst [vmem:[%s302 + $0x8] sm:$0xf] %v1778
          %1907 = vst [vmem:[%s302 + $0xc] sm:$0xf] %v1779
          %1908 = vst [vmem:[%s302 + $0x10] sm:$0xf] %v1780
          %1909 = vst [vmem:[%s302 + $0x14] sm:$0xf] %v1781
          %1910 = vst [vmem:[%s302 + $0x18] sm:$0xf] %v1782
          %1911 = vst [vmem:[%s302 + $0x1c] sm:$0xf] %v1783
          %1912 = vst [vmem:[%s302 + $0x20] sm:$0xf] %v1784
          %1913 = vst [vmem:[%s302 + $0x24] sm:$0xf] %v1785
          %1914 = vst [vmem:[%s302 + $0x28] sm:$0xf] %v1786
          %1915 = vst [vmem:[%s302 + $0x2c] sm:$0xf] %v1787
          %1916 = vst [vmem:[%s302 + $0x30] sm:$0xf] %v1788
          %1917 = vst [vmem:[%s302 + $0x34] sm:$0xf] %v1789
          %1918 = vst [vmem:[%s302 + $0x38] sm:$0xf] %v1790
          %1919 = vst [vmem:[%s302 + $0x3c] sm:$0xf] %v1791
          %1920 = vst [vmem:[%s302 + $0x40] sm:$0xf] %v1792
          %1921 = vst [vmem:[%s302 + $0x44] sm:$0xf] %v1793
          %1922 = vst [vmem:[%s302 + $0x48] sm:$0xf] %v1794
          %1923 = vst [vmem:[%s302 + $0x4c] sm:$0xf] %v1795
          %1924 = vst [vmem:[%s302 + $0x50] sm:$0xf] %v1796
          %1925 = vst [vmem:[%s302 + $0x54] sm:$0xf] %v1797
          %1926 = vst [vmem:[%s302 + $0x58] sm:$0xf] %v1798
          %1927 = vst [vmem:[%s302 + $0x5c] sm:$0xf] %v1799
          %1928 = vst [vmem:[%s302 + $0x60] sm:$0xf] %v1800
          %1929 = vst [vmem:[%s302 + $0x64] sm:$0xf] %v1801
          %1930 = vst [vmem:[%s302 + $0x68] sm:$0xf] %v1802
          %1931 = vst [vmem:[%s302 + $0x6c] sm:$0xf] %v1803
          %1932 = vst [vmem:[%s302 + $0x70] sm:$0xf] %v1804
          %1933 = vst [vmem:[%s302 + $0x74] sm:$0xf] %v1805
          %1934 = vst [vmem:[%s302 + $0x78] sm:$0xf] %v1806
          %1935 = vst [vmem:[%s302 + $0x7c] sm:$0xf] %v1807
          %1936 = vst [vmem:[%s302 + $0x80] sm:$0xf] %v1808
          %1937 = vst [vmem:[%s302 + $0x84] sm:$0xf] %v1809
          %1938 = vst [vmem:[%s302 + $0x88] sm:$0xf] %v1810
          %1939 = vst [vmem:[%s302 + $0x8c] sm:$0xf] %v1811
          %1940 = vst [vmem:[%s302 + $0x90] sm:$0xf] %v1812
          %1941 = vst [vmem:[%s302 + $0x94] sm:$0xf] %v1813
          %1942 = vst [vmem:[%s302 + $0x98] sm:$0xf] %v1814
          %1943 = vst [vmem:[%s302 + $0x9c] sm:$0xf] %v1815
          %1944 = vst [vmem:[%s302 + $0xa0] sm:$0xf] %v1816
          %1945 = vst [vmem:[%s302 + $0xa4] sm:$0xf] %v1817
          %1946 = vst [vmem:[%s302 + $0xa8] sm:$0xf] %v1818
          %1947 = vst [vmem:[%s302 + $0xac] sm:$0xf] %v1819
          %1948 = vst [vmem:[%s302 + $0xb0] sm:$0xf] %v1820
          %1949 = vst [vmem:[%s302 + $0xb4] sm:$0xf] %v1821
          %1950 = vst [vmem:[%s302 + $0xb8] sm:$0xf] %v1822
          %1951 = vst [vmem:[%s302 + $0xbc] sm:$0xf] %v1823
          %1952 = vst [vmem:[%s302 + $0xc0] sm:$0xf] %v1824
          %1953 = vst [vmem:[%s302 + $0xc4] sm:$0xf] %v1825
          %1954 = vst [vmem:[%s302 + $0xc8] sm:$0xf] %v1826
          %1955 = vst [vmem:[%s302 + $0xcc] sm:$0xf] %v1827
          %1956 = vst [vmem:[%s302 + $0xd0] sm:$0xf] %v1828
          %1957 = vst [vmem:[%s302 + $0xd4] sm:$0xf] %v1829
          %1958 = vst [vmem:[%s302 + $0xd8] sm:$0xf] %v1830
          %1959 = vst [vmem:[%s302 + $0xdc] sm:$0xf] %v1831
          %1960 = vst [vmem:[%s302 + $0xe0] sm:$0xf] %v1832
          %1961 = vst [vmem:[%s302 + $0xe4] sm:$0xf] %v1833
          %1962 = vst [vmem:[%s302 + $0xe8] sm:$0xf] %v1834
          %1963 = vst [vmem:[%s302 + $0xec] sm:$0xf] %v1835
          %1964 = vst [vmem:[%s302 + $0xf0] sm:$0xf] %v1836
          %1965 = vst [vmem:[%s302 + $0xf4] sm:$0xf] %v1837
          %1966 = vst [vmem:[%s302 + $0xf8] sm:$0xf] %v1838
          %1967 = vst [vmem:[%s302 + $0xfc] sm:$0xf] %v1839
        $region52: #{tpu_custom_call.1} parent=35 // pred_fallthru
          _
        %s1968 = sand.u32 %s170, 1
        %s1969 = scalar_lea.sflag [#allocation5], %s1968
        %s1970 = sand.u32 %s170, 1
        %s1971 = smul.addr %s1970, 256
        %s1972 = scalar_lea.vmem [#allocation8], %s1971
        // Predicated region
        $region53: #{tpu_custom_call.1} parent=35 // pred_check
          %p1973 = pneg %p180
        $region54: #{tpu_custom_call.1} parent=35 // pred_check_branch
          %1975 = sbr.rel (%p1973) target = $region56
        $region55: #{tpu_custom_call.1} parent=35 // pred_region
          %s1976 = smul.u32 64, %s29
          %s1978 = ssub.s32 4096, 4096
          %1979 = vsyncadd %s1969, %s1978
          %s1980 = sadd.s32 %s30, %s1976
          %s1981 = smul.addr %s28, 128
          %s1982 = sadd.s32 %s1980, %s1981
          %s1983 = smul.addr %s1982, 64
          %s1984 = scalar_lea.hbm %s4, %s1983
          %s1985 = sshll.u32 %s1972, 4
          %s1986 = int_to_ptr.vmem [resolvable:$true] %s1985
          %1991 = dma.vmem_to_hbm [thread:$0]  %s1986, 4096, %s1984, %s1969, 64, 64, 4
        $region56: #{tpu_custom_call.1} parent=35 // pred_fallthru
          _
      $region36: #{tpu_custom_call.1} parent=5 // pred_fallthru
        _
      %p1992 = scmp.le.s32.totalorder 2, %s17
      // Predicated region
      $region57: #{tpu_custom_call.1} parent=5 // pred_check
        %p1993 = pneg %p1992
      $region58: #{tpu_custom_call.1} parent=5 // pred_check_branch
        %1995 = sbr.rel (%p1993) target = $region60
      $region59: #{tpu_custom_call.1} parent=5 // pred_region
        %s1996 = ssub.s32 %s17, 2
        // Predicated region
        $region61: #{tpu_custom_call.1} parent=59 // pred_check
          %p1997 = pneg %p186
        $region62: #{tpu_custom_call.1} parent=59 // pred_check_branch
          %1999 = sbr.rel (%p1997) target = $region64
        $region63: #{tpu_custom_call.1} parent=59 // pred_region
          %s2000 = sand.u32 %s171, 1
          %s2001 = scalar_lea.sflag [#allocation5], %s2000
          %s2002 = sand.u32 %s171, 1
          %s2003 = smul.addr %s2002, 256
          %s2004 = scalar_lea.vmem [#allocation8], %s2003
          %2005 = dma.done %s2001, 4096
        $region64: #{tpu_custom_call.1} parent=59 // pred_fallthru
          _
      $region60: #{tpu_custom_call.1} parent=5 // pred_fallthru
        _
    $region6: #{tpu_custom_call.1} parent=1 // loop_footer
      %s21 = sadd.s32 1, %s17
    $region7: #{tpu_custom_call.1} parent=1 // loop_footer_branch
      %16 = sbr.rel target = $region3
    $region8: #{tpu_custom_call.1} parent=1 // loop_exit
      _
    %2006 = vsyncpa [#allocation4], 1
    %s2007 = scalar_lea.sflag [#allocation4], 1
    %2008 = vsyncpa %s2007, 1
    %2009 = vsyncpa [#allocation7], 1
    %2010 = vsyncpa [#allocation5], 1
    %s2011 = scalar_lea.sflag [#allocation5], 1
    %2012 = vsyncpa %s2011, 1

</llo_original>
